<compile_context>
chip_gen: v7x
topology: tpu7x:2x2x1
jax: 0.10.0
libtpu: 0.0.40
codegen_flags: <defaults>
</compile_context>

<pallas_src>
import functools
import math

import jax
import jax.numpy as jnp
from jax import lax
from jax.experimental import pallas as pl
from jax.experimental.pallas import tpu as pltpu

_GELU_C = math.sqrt(2.0 / math.pi)
_LANE = 128


def _layernorm(x, gamma, beta, eps=1e-5):
    mu = jnp.mean(x, axis=-1, keepdims=True)
    xc = x - mu
    var = jnp.mean(xc * xc, axis=-1, keepdims=True)
    return xc * lax.rsqrt(var + eps) * gamma + beta


def _gelu_tanh(x):
    # Matches the module's explicit tanh-approx GELU.
    return 0.5 * x * (1.0 + jnp.tanh(_GELU_C * (x + 0.044715 * x * x * x)))


# ------------------------------ fused kernel ------------------------------- #

def transformer_layer_kernel(x_ref, pos_ref, vecs_ref, wqkv_ref, wout_ref,
                             w1_ref, w2_ref, o_ref, xf_ref, *,
                             heads, dim_head, mlp_dim):
    bb, n, d = x_ref.shape
    inner = heads * dim_head
    m = bb * n
    layer = pl.program_id(1)
    n_layers = pl.num_programs(1)

    # ---- first layer step: positional-embedding add into resident scratch ----
    @pl.when(layer == 0)
    def _init():
        xf_ref[...] = (x_ref[...].astype(jnp.float32) +
                       pos_ref[...].astype(jnp.float32)).reshape(m, d)

    # per-layer small vectors (f32) packed as rows of one (7, vec_w) block
    ln1_g = vecs_ref[0:1, :d]
    ln1_b = vecs_ref[1:2, :d]
    b_out = vecs_ref[2:3, :d]
    ln2_g = vecs_ref[3:4, :d]
    ln2_b = vecs_ref[4:5, :d]
    b2 = vecs_ref[5:6, :d]
    b1 = vecs_ref[6:7, :mlp_dim]

    xf = xf_ref[...]                                            # (m, d) f32

    # ---------------- PreNorm + multi-head attention + residual --------------
    xn = _layernorm(xf, ln1_g, ln1_b)
    # 1/sqrt(dim_head) is pre-folded into the Q columns of W_qkv (bf16).
    qkv = jnp.dot(xn.astype(jnp.bfloat16), wqkv_ref[...],
                  preferred_element_type=jnp.float32)           # (m, 3*inner)

    def split_heads(t):      # (m, inner) -> (heads*bb, n, dim_head)
        t = pltpu.einshape("mhd->hmd", t.reshape(m, heads, dim_head))
        return t.reshape(heads * bb, n, dim_head)

    q = split_heads(qkv[:, :inner])
    k = split_heads(qkv[:, inner:2 * inner])
    v = split_heads(qkv[:, 2 * inner:])

    dots = jnp.einsum('bnd,bmd->bnm', q.astype(jnp.bfloat16),
                      k.astype(jnp.bfloat16),
                      preferred_element_type=jnp.float32)       # (heads*bb, n, n)
    dots = dots - jnp.max(dots, axis=-1, keepdims=True)
    e = jnp.exp(dots)
    # approx reciprocal runs on the EUP; rows sum to 1 within ~2^-12.
    attn = e * pl.reciprocal(jnp.sum(e, axis=-1, keepdims=True), approx=True)
    ctx = jnp.einsum('bnm,bmd->bnd', attn.astype(jnp.bfloat16),
                     v.astype(jnp.bfloat16),
                     preferred_element_type=jnp.float32)        # (heads*bb, n, dh)
    ctx = pltpu.einshape("hmd->mhd",
                         ctx.reshape(heads, m, dim_head)).reshape(m, inner)

    attn_out = jnp.dot(ctx.astype(jnp.bfloat16), wout_ref[...],
                       preferred_element_type=jnp.float32) + b_out
    xf = xf + attn_out

    # ---------------- PreNorm + FeedForward (tanh GELU) + residual -----------
    xn2 = _layernorm(xf, ln2_g, ln2_b)
    h1 = jnp.dot(xn2.astype(jnp.bfloat16), w1_ref[...],
                 preferred_element_type=jnp.float32) + b1
    g = _gelu_tanh(h1)
    h2 = jnp.dot(g.astype(jnp.bfloat16), w2_ref[...],
                 preferred_element_type=jnp.float32) + b2
    xf = xf + h2
    xf_ref[...] = xf

    # ---- last layer step: fused sequence-mean, lane-dense (padded) store ----
    @pl.when(layer == n_layers - 1)
    def _finalize():
        mean = jnp.sum(xf.reshape(bb, n, d), axis=1) * (1.0 / n)   # (bb, d)
        out_d = o_ref.shape[-1]
        if out_d != d:     # pad to a multiple of 128 lanes -> unmasked stores
            mean = jnp.concatenate(
                [mean, jnp.zeros((bb, out_d - d), jnp.float32)], axis=-1)
        o_ref[...] = mean.astype(o_ref.dtype)


# ------------------------------ param packing ------------------------------ #

def pack_params(params, *, input_dim, heads, dim_head, mlp_dim):
    """Stack per-layer weights (bf16) along a leading depth axis, pack the
    small per-layer vectors into one (depth, 7, vec_w) f32 array, and fold
    1/sqrt(dim_head) into the Q columns of W_qkv."""
    d = input_dim
    inner = heads * dim_head
    scale = dim_head ** (-0.5)
    vec_w = max(d, mlp_dim)

    def pad_row(v):
        v = v.reshape(-1).astype(jnp.float32)
        return jnp.pad(v, (0, vec_w - v.shape[0]))

    col_scale = jnp.concatenate([jnp.full((inner,), scale, jnp.float32),
                                 jnp.ones((2 * inner,), jnp.float32)])

    vecs, wqkv, wout, w1, w2 = [], [], [], [], []
    for lp in params["layers"]:
        (ln1g, ln1b, wq, wo, bo, ln2g, ln2b, wl1, bl1, wl2, bl2) = lp
        vecs.append(jnp.stack([pad_row(ln1g), pad_row(ln1b), pad_row(bo),
                               pad_row(ln2g), pad_row(ln2b), pad_row(bl2),
                               pad_row(bl1)]))
        wqkv.append((wq.astype(jnp.float32) * col_scale[None, :])
                    .astype(jnp.bfloat16))
        wout.append(wo.astype(jnp.bfloat16))
        w1.append(wl1.astype(jnp.bfloat16))
        w2.append(wl2.astype(jnp.bfloat16))

    return (params["pos_embedding"].astype(jnp.float32), jnp.stack(vecs),
            jnp.stack(wqkv), jnp.stack(wout), jnp.stack(w1), jnp.stack(w2))


# --------------------------------- wrapper ---------------------------------- #

def _pick_batch_block(b, n, batch_block):
    if batch_block is not None:
        assert b % batch_block == 0, (b, batch_block)
        return batch_block
    target_rows = 256        # MXU-native M tile on v6e/v7x (multiple of v5e's 128)
    bb = min(b, max(1, target_rows // max(n, 1)))
    while b % bb:            # must divide b
        bb -= 1
    # If there is row budget to spare, split into >=2 blocks so the "parallel"
    # batch axis can shard across v7x's two TensorCores.
    if b // bb < 2 and b % 2 == 0 and (b // 2) * n >= target_rows:
        bb = b // 2
    return bb


def _vmem_limit_bytes(bb, n, d, inner, mlp_dim, heads):
    m = bb * n
    w_layer = 2 * (d * 3 * inner + inner * d + d * mlp_dim + mlp_dim * d)  # bf16
    weights = 2 * w_layer     # two layers in flight (pipeline double-buffer)
    acts = 4 * (2 * m * d + m * d + m * 3 * inner + m * mlp_dim
                + bb * heads * n * n + m * inner + 2 * m * d)
    need = weights + acts + (8 << 20)      # headroom for compiler temps
    try:
        cap = int(0.85 * pltpu.get_tpu_info().vmem_capacity_bytes)
    except Exception:
        cap = 54 << 20                     # safe for v7x's 64 MiB VMEM
    return max(32 << 20, min(need, cap))


def temporal_transformer_mean(x, params, *, num_patches, input_dim, depth,
                              heads, dim_head, mlp_dim, batch_block=None):
    # x.contiguous().view(-1, num_patches, input_dim)
    x = x.reshape(-1, num_patches, input_dim)
    b, n, d = x.shape
    inner = heads * dim_head
    bb = _pick_batch_block(b, n, batch_block)

    pos, vecs, wqkv, wout, w1, w2 = pack_params(
        params, input_dim=input_dim, heads=heads, dim_head=dim_head,
        mlp_dim=mlp_dim)
    vec_w = vecs.shape[-1]

    out_d = d if d % _LANE == 0 else ((d + _LANE - 1) // _LANE) * _LANE

    kernel = functools.partial(transformer_layer_kernel, heads=heads,
                               dim_head=dim_head, mlp_dim=mlp_dim)

    in_specs = [
        pl.BlockSpec((bb, n, d), lambda i, l: (i, 0, 0)),            # activations
        pl.BlockSpec((1, n, d), lambda i, l: (0, 0, 0)),             # pos embedding
        pl.BlockSpec((None, 7, vec_w), lambda i, l: (l, 0, 0)),      # LN params/biases
        pl.BlockSpec((None, d, 3 * inner), lambda i, l: (l, 0, 0)),  # W_qkv (bf16)
        pl.BlockSpec((None, inner, d), lambda i, l: (l, 0, 0)),      # W_out (bf16)
        pl.BlockSpec((None, d, mlp_dim), lambda i, l: (l, 0, 0)),    # W1 (bf16)
        pl.BlockSpec((None, mlp_dim, d), lambda i, l: (l, 0, 0)),    # W2 (bf16)
    ]

    out = pl.pallas_call(
        kernel,
        out_shape=jax.ShapeDtypeStruct((b, out_d), x.dtype),
        grid=(b // bb, depth),
        in_specs=in_specs,
        out_specs=pl.BlockSpec((bb, out_d), lambda i, l: (i, 0)),
        scratch_shapes=[pltpu.VMEM((bb * n, d), jnp.float32)],       # resident activations
        compiler_params=pltpu.CompilerParams(
            dimension_semantics=("parallel", "arbitrary"),
            vmem_limit_bytes=_vmem_limit_bytes(bb, n, d, inner, mlp_dim, heads)),
    )(x, pos, vecs, wqkv, wout, w1, w2)
    return out[:, :d]


# --------------------------- deterministic init ------------------------------ #

def init_params(key, *, num_patches, input_dim, depth, heads, mlp_dim, dim_head):
    inner = heads * dim_head
    keys = jax.random.split(key, 2 + depth)
    params = {
        "pos_embedding": jax.random.normal(keys[0], (1, num_patches, input_dim),
                                           jnp.float32) * 0.02,
        "layers": [],
    }
    for l in range(depth):
        ks = jax.random.split(keys[2 + l], 6)
        d = input_dim
        layer = (
            jnp.ones((1, d), jnp.float32),                                   # ln1 gamma
            jnp.zeros((1, d), jnp.float32),                                  # ln1 beta
            jax.random.normal(ks[0], (d, 3 * inner), jnp.float32) * 0.05,    # W_qkv
            jax.random.normal(ks[1], (inner, d), jnp.float32) * 0.05,        # W_out
            jax.random.normal(ks[2], (1, d), jnp.float32) * 0.01,            # b_out
            jnp.ones((1, d), jnp.float32),                                   # ln2 gamma
            jnp.zeros((1, d), jnp.float32),                                  # ln2 beta
            jax.random.normal(ks[3], (d, mlp_dim), jnp.float32) * 0.05,      # W1
            jax.random.normal(ks[4], (1, mlp_dim), jnp.float32) * 0.01,      # b1
            jax.random.normal(ks[5], (mlp_dim, d), jnp.float32) * 0.05,      # W2
            jnp.zeros((1, d), jnp.float32),                                  # b2
        )
        params["layers"].append(layer)
    return params


# ---------------------------------- main ------------------------------------ #

if __name__ == "__main__":
    num_patches = 8      # sequence length n
    input_dim = 32       # model dim
    depth = 2
    heads = 4
    dim_head = 16
    mlp_dim = 64
    batch = 2

    key = jax.random.PRNGKey(0)
    k_x, k_p = jax.random.split(key)
    x = jax.random.normal(k_x, (batch, num_patches, input_dim), jnp.float32)

    params = init_params(k_p, num_patches=num_patches, input_dim=input_dim,
                         depth=depth, heads=heads, mlp_dim=mlp_dim,
                         dim_head=dim_head)

    out = temporal_transformer_mean(x, params, num_patches=num_patches,
                                    input_dim=input_dim, depth=depth,
                                    heads=heads, dim_head=dim_head,
                                    mlp_dim=mlp_dim)
    out = jax.block_until_ready(out)
    assert out.shape == (batch, input_dim), out.shape
    assert bool(jnp.all(jnp.isfinite(out))), "non-finite output"
    print("KERNEL_OK")
</pallas_src>

<mosaic_0001>
module attributes {stable_mosaic.version = 11 : i64} {
  func.func @transformer_layer_kernel(%arg0: i32, %arg1: i32, %arg2: memref<2x8x32xf32, #tpu.memory_space<vmem>>, %arg3: memref<1x8x32xf32, #tpu.memory_space<vmem>>, %arg4: memref<1x7x64xf32, #tpu.memory_space<vmem>>, %arg5: memref<1x32x192xbf16, #tpu.memory_space<vmem>>, %arg6: memref<1x64x32xbf16, #tpu.memory_space<vmem>>, %arg7: memref<1x32x64xbf16, #tpu.memory_space<vmem>>, %arg8: memref<1x64x32xbf16, #tpu.memory_space<vmem>>, %arg9: memref<2x128xf32, #tpu.memory_space<vmem>>, %arg10: memref<16x32xf32, #tpu.memory_space<vmem>>) attributes {dimension_semantics = [#tpu.dimension_semantics<parallel>, #tpu.dimension_semantics<arbitrary>], iteration_bounds = array<i64: 1, 2>, scalar_prefetch = 0 : i64, scratch_operands = 1 : i64, tpu.core_type = #tpu.core_type<tc>, window_params = [{transform_indices = @transform_0, window_bounds = array<i64: 2, 8, 32>}, {pipeline_mode = #tpu.pipeline_mode<synchronous>, transform_indices = @transform_1, window_bounds = array<i64: 1, 8, 32>}, {transform_indices = @transform_2, window_bounds = array<i64: 1, 7, 64>}, {transform_indices = @transform_3, window_bounds = array<i64: 1, 32, 192>}, {transform_indices = @transform_4, window_bounds = array<i64: 1, 64, 32>}, {transform_indices = @transform_5, window_bounds = array<i64: 1, 32, 64>}, {transform_indices = @transform_6, window_bounds = array<i64: 1, 64, 32>}, {transform_indices = @transform_7, window_bounds = array<i64: 2, 128>}]} {
    %c0_i32 = arith.constant 0 : i32
    %0 = arith.cmpi eq, %arg1, %c0_i32 : i32
    %1 = arith.extui %0 : i1 to i32
    %c0_i32_0 = arith.constant 0 : i32
    %2 = arith.cmpi ne, %1, %c0_i32_0 : i32
    scf.if %2 {
      %c0_53 = arith.constant 0 : index
      %c0_54 = arith.constant 0 : index
      %c0_55 = arith.constant 0 : index
      %130 = vector.load %arg2[%c0_53, %c0_54, %c0_55] : memref<2x8x32xf32, #tpu.memory_space<vmem>>, vector<2x8x32xf32>
      %c0_56 = arith.constant 0 : index
      %c0_57 = arith.constant 0 : index
      %c0_58 = arith.constant 0 : index
      %131 = vector.load %arg3[%c0_56, %c0_57, %c0_58] : memref<1x8x32xf32, #tpu.memory_space<vmem>>, vector<1x8x32xf32>
      %132 = vector.broadcast %131 : vector<1x8x32xf32> to vector<2x8x32xf32>
      %133 = arith.addf %130, %132 : vector<2x8x32xf32>
      %134 = vector.shape_cast %133 : vector<2x8x32xf32> to vector<16x32xf32>
      %c0_59 = arith.constant 0 : index
      %c0_60 = arith.constant 0 : index
      %135 = vector.load %arg10[%c0_59, %c0_60] : memref<16x32xf32, #tpu.memory_space<vmem>>, vector<16x32xf32>
      tpu.vector_store %arg10[%c0_59, %c0_60], %134 {strides = array<i32>} : memref<16x32xf32, #tpu.memory_space<vmem>>, vector<16x32xf32>,
    } else {
    }
    %c0 = arith.constant 0 : index
    %c0_1 = arith.constant 0 : index
    %c0_2 = arith.constant 0 : index
    %3 = vector.load %arg4[%c0, %c0_1, %c0_2] : memref<1x7x64xf32, #tpu.memory_space<vmem>>, vector<1x1x32xf32>
    %4 = vector.shape_cast %3 : vector<1x1x32xf32> to vector<1x32xf32>
    %c0_3 = arith.constant 0 : index
    %c1 = arith.constant 1 : index
    %c0_4 = arith.constant 0 : index
    %5 = vector.load %arg4[%c0_3, %c1, %c0_4] : memref<1x7x64xf32, #tpu.memory_space<vmem>>, vector<1x1x32xf32>
    %6 = vector.shape_cast %5 : vector<1x1x32xf32> to vector<1x32xf32>
    %c0_5 = arith.constant 0 : index
    %c2 = arith.constant 2 : index
    %c0_6 = arith.constant 0 : index
    %7 = vector.load %arg4[%c0_5, %c2, %c0_6] : memref<1x7x64xf32, #tpu.memory_space<vmem>>, vector<1x1x32xf32>
    %8 = vector.shape_cast %7 : vector<1x1x32xf32> to vector<1x32xf32>
    %c0_7 = arith.constant 0 : index
    %c3 = arith.constant 3 : index
    %c0_8 = arith.constant 0 : index
    %9 = vector.load %arg4[%c0_7, %c3, %c0_8] : memref<1x7x64xf32, #tpu.memory_space<vmem>>, vector<1x1x32xf32>
    %10 = vector.shape_cast %9 : vector<1x1x32xf32> to vector<1x32xf32>
    %c0_9 = arith.constant 0 : index
    %c4 = arith.constant 4 : index
    %c0_10 = arith.constant 0 : index
    %11 = vector.load %arg4[%c0_9, %c4, %c0_10] : memref<1x7x64xf32, #tpu.memory_space<vmem>>, vector<1x1x32xf32>
    %12 = vector.shape_cast %11 : vector<1x1x32xf32> to vector<1x32xf32>
    %c0_11 = arith.constant 0 : index
    %c5 = arith.constant 5 : index
    %c0_12 = arith.constant 0 : index
    %13 = vector.load %arg4[%c0_11, %c5, %c0_12] : memref<1x7x64xf32, #tpu.memory_space<vmem>>, vector<1x1x32xf32>
    %14 = vector.shape_cast %13 : vector<1x1x32xf32> to vector<1x32xf32>
    %c0_13 = arith.constant 0 : index
    %c6 = arith.constant 6 : index
    %c0_14 = arith.constant 0 : index
    %15 = vector.load %arg4[%c0_13, %c6, %c0_14] : memref<1x7x64xf32, #tpu.memory_space<vmem>>, vector<1x1x64xf32>
    %16 = vector.shape_cast %15 : vector<1x1x64xf32> to vector<1x64xf32>
    %c0_15 = arith.constant 0 : index
    %c0_16 = arith.constant 0 : index
    %17 = vector.load %arg10[%c0_15, %c0_16] : memref<16x32xf32, #tpu.memory_space<vmem>>, vector<16x32xf32>
    %cst = arith.constant dense<0.000000e+00> : vector<16xf32>
    %18 = vector.multi_reduction <add>, %17, %cst [1] : vector<16x32xf32> to vector<16xf32>
    %19 = vector.shape_cast %18 : vector<16xf32> to vector<16x1xf32>
    %cst_17 = arith.constant 3.200000e+01 : f32
    %20 = vector.broadcast %cst_17 : f32 to vector<16x1xf32>
    %21 = arith.divf %19, %20 : vector<16x1xf32>
    %22 = vector.broadcast %21 : vector<16x1xf32> to vector<16x32xf32>
    %23 = arith.subf %17, %22 : vector<16x32xf32>
    %24 = arith.mulf %23, %23 : vector<16x32xf32>
    %cst_18 = arith.constant dense<0.000000e+00> : vector<16xf32>
    %25 = vector.multi_reduction <add>, %24, %cst_18 [1] : vector<16x32xf32> to vector<16xf32>
    %26 = vector.shape_cast %25 : vector<16xf32> to vector<16x1xf32>
    %cst_19 = arith.constant 3.200000e+01 : f32
    %27 = vector.broadcast %cst_19 : f32 to vector<16x1xf32>
    %28 = arith.divf %26, %27 : vector<16x1xf32>
    %cst_20 = arith.constant 9.99999974E-6 : f32
    %29 = vector.broadcast %cst_20 : f32 to vector<16x1xf32>
    %30 = arith.addf %28, %29 : vector<16x1xf32>
    %31 = math.rsqrt %30 : vector<16x1xf32>
    %32 = vector.broadcast %31 : vector<16x1xf32> to vector<16x32xf32>
    %33 = arith.mulf %23, %32 : vector<16x32xf32>
    %34 = vector.broadcast %4 : vector<1x32xf32> to vector<16x32xf32>
    %35 = arith.mulf %33, %34 : vector<16x32xf32>
    %36 = vector.broadcast %6 : vector<1x32xf32> to vector<16x32xf32>
    %37 = arith.addf %35, %36 : vector<16x32xf32>
    %38 = arith.truncf %37 : vector<16x32xf32> to vector<16x32xbf16>
    %c0_21 = arith.constant 0 : index
    %c0_22 = arith.constant 0 : index
    %c0_23 = arith.constant 0 : index
    %39 = vector.load %arg5[%c0_21, %c0_22, %c0_23] : memref<1x32x192xbf16, #tpu.memory_space<vmem>>, vector<1x32x192xbf16>
    %40 = vector.shape_cast %39 : vector<1x32x192xbf16> to vector<32x192xbf16>
    %cst_24 = arith.constant dense<0.000000e+00> : vector<16x192xf32>
    %41 = tpu.matmul %38, %40, %cst_24 {dimension_numbers = #tpu.dot_dimension_numbers<[1], [0], [0], [1], [0, 0, 1, 1], [], []>} : vector<16x32xbf16>, vector<32x192xbf16>, vector<16x192xf32> -> vector<16x192xf32>
    %42 = vector.extract_strided_slice %41 {offsets = [0, 0], sizes = [16, 64], strides = [1, 1]} : vector<16x192xf32> to vector<16x64xf32>
    %43 = vector.shape_cast %42 : vector<16x64xf32> to vector<16x4x16xf32>
    %44 = tpu.transpose %43, [1, 0, 2] : vector<16x4x16xf32> -> vector<4x16x16xf32>
    %45 = vector.shape_cast %44 : vector<4x16x16xf32> to vector<8x8x16xf32>
    %46 = vector.extract_strided_slice %41 {offsets = [0, 64], sizes = [16, 64], strides = [1, 1]} : vector<16x192xf32> to vector<16x64xf32>
    %47 = vector.shape_cast %46 : vector<16x64xf32> to vector<16x4x16xf32>
    %48 = tpu.transpose %47, [1, 0, 2] : vector<16x4x16xf32> -> vector<4x16x16xf32>
    %49 = vector.shape_cast %48 : vector<4x16x16xf32> to vector<8x8x16xf32>
    %50 = vector.extract_strided_slice %41 {offsets = [0, 128], sizes = [16, 64], strides = [1, 1]} : vector<16x192xf32> to vector<16x64xf32>
    %51 = vector.shape_cast %50 : vector<16x64xf32> to vector<16x4x16xf32>
    %52 = tpu.transpose %51, [1, 0, 2] : vector<16x4x16xf32> -> vector<4x16x16xf32>
    %53 = vector.shape_cast %52 : vector<4x16x16xf32> to vector<8x8x16xf32>
    %54 = arith.truncf %45 : vector<8x8x16xf32> to vector<8x8x16xbf16>
    %55 = arith.truncf %49 : vector<8x8x16xf32> to vector<8x8x16xbf16>
    "tpu.trace_start"() <{level = 10 : i32, message = "bnd,bmd->bnm"}> : () -> ()
    %cst_25 = arith.constant dense<0.000000e+00> : vector<8x8x8xf32>
    %56 = tpu.matmul %54, %55, %cst_25 {dimension_numbers = #tpu.dot_dimension_numbers<[2], [2], [1], [1], [0, 0, 0, 1, 1, 1], [0], [0]>} : vector<8x8x16xbf16>, vector<8x8x16xbf16>, vector<8x8x8xf32> -> vector<8x8x8xf32>
    "tpu.trace_stop"() : () -> ()
    %cst_26 = arith.constant dense<0xFF800000> : vector<8x8xf32>
    %57 = vector.multi_reduction <maximumf>, %56, %cst_26 [2] : vector<8x8x8xf32> to vector<8x8xf32>
    %58 = vector.shape_cast %57 : vector<8x8xf32> to vector<8x8x1xf32>
    %59 = vector.broadcast %58 : vector<8x8x1xf32> to vector<8x8x8xf32>
    %60 = arith.subf %56, %59 : vector<8x8x8xf32>
    %61 = math.exp %60 : vector<8x8x8xf32>
    %cst_27 = arith.constant dense<0.000000e+00> : vector<8x8xf32>
    %62 = vector.multi_reduction <add>, %61, %cst_27 [2] : vector<8x8x8xf32> to vector<8x8xf32>
    %63 = vector.shape_cast %62 : vector<8x8xf32> to vector<8x8x1xf32>
    %64 = tpu.reciprocal %63 {approx = true} : vector<8x8x1xf32> -> vector<8x8x1xf32>
    %65 = vector.broadcast %64 : vector<8x8x1xf32> to vector<8x8x8xf32>
    %66 = arith.mulf %61, %65 : vector<8x8x8xf32>
    %67 = arith.truncf %66 : vector<8x8x8xf32> to vector<8x8x8xbf16>
    %68 = arith.truncf %53 : vector<8x8x16xf32> to vector<8x8x16xbf16>
    "tpu.trace_start"() <{level = 10 : i32, message = "bnm,bmd->bnd"}> : () -> ()
    %cst_28 = arith.constant dense<0.000000e+00> : vector<8x8x16xf32>
    %69 = tpu.matmul %67, %68, %cst_28 {dimension_numbers = #tpu.dot_dimension_numbers<[2], [1], [1], [2], [0, 0, 0, 1, 1, 2], [0], [0]>} : vector<8x8x8xbf16>, vector<8x8x16xbf16>, vector<8x8x16xf32> -> vector<8x8x16xf32>
    "tpu.trace_stop"() : () -> ()
    %70 = vector.shape_cast %69 : vector<8x8x16xf32> to vector<4x16x16xf32>
    %71 = tpu.transpose %70, [1, 0, 2] : vector<4x16x16xf32> -> vector<16x4x16xf32>
    %72 = vector.shape_cast %71 : vector<16x4x16xf32> to vector<16x64xf32>
    %73 = arith.truncf %72 : vector<16x64xf32> to vector<16x64xbf16>
    %c0_29 = arith.constant 0 : index
    %c0_30 = arith.constant 0 : index
    %c0_31 = arith.constant 0 : index
    %74 = vector.load %arg6[%c0_29, %c0_30, %c0_31] : memref<1x64x32xbf16, #tpu.memory_space<vmem>>, vector<1x64x32xbf16>
    %75 = vector.shape_cast %74 : vector<1x64x32xbf16> to vector<64x32xbf16>
    %cst_32 = arith.constant dense<0.000000e+00> : vector<16x32xf32>
    %76 = tpu.matmul %73, %75, %cst_32 {dimension_numbers = #tpu.dot_dimension_numbers<[1], [0], [0], [1], [0, 0, 1, 1], [], []>} : vector<16x64xbf16>, vector<64x32xbf16>, vector<16x32xf32> -> vector<16x32xf32>
    %77 = vector.broadcast %8 : vector<1x32xf32> to vector<16x32xf32>
    %78 = arith.addf %76, %77 : vector<16x32xf32>
    %79 = arith.addf %17, %78 : vector<16x32xf32>
    %cst_33 = arith.constant dense<0.000000e+00> : vector<16xf32>
    %80 = vector.multi_reduction <add>, %79, %cst_33 [1] : vector<16x32xf32> to vector<16xf32>
    %81 = vector.shape_cast %80 : vector<16xf32> to vector<16x1xf32>
    %cst_34 = arith.constant 3.200000e+01 : f32
    %82 = vector.broadcast %cst_34 : f32 to vector<16x1xf32>
    %83 = arith.divf %81, %82 : vector<16x1xf32>
    %84 = vector.broadcast %83 : vector<16x1xf32> to vector<16x32xf32>
    %85 = arith.subf %79, %84 : vector<16x32xf32>
    %86 = arith.mulf %85, %85 : vector<16x32xf32>
    %cst_35 = arith.constant dense<0.000000e+00> : vector<16xf32>
    %87 = vector.multi_reduction <add>, %86, %cst_35 [1] : vector<16x32xf32> to vector<16xf32>
    %88 = vector.shape_cast %87 : vector<16xf32> to vector<16x1xf32>
    %cst_36 = arith.constant 3.200000e+01 : f32
    %89 = vector.broadcast %cst_36 : f32 to vector<16x1xf32>
    %90 = arith.divf %88, %89 : vector<16x1xf32>
    %cst_37 = arith.constant 9.99999974E-6 : f32
    %91 = vector.broadcast %cst_37 : f32 to vector<16x1xf32>
    %92 = arith.addf %90, %91 : vector<16x1xf32>
    %93 = math.rsqrt %92 : vector<16x1xf32>
    %94 = vector.broadcast %93 : vector<16x1xf32> to vector<16x32xf32>
    %95 = arith.mulf %85, %94 : vector<16x32xf32>
    %96 = vector.broadcast %10 : vector<1x32xf32> to vector<16x32xf32>
    %97 = arith.mulf %95, %96 : vector<16x32xf32>
    %98 = vector.broadcast %12 : vector<1x32xf32> to vector<16x32xf32>
    %99 = arith.addf %97, %98 : vector<16x32xf32>
    %100 = arith.truncf %99 : vector<16x32xf32> to vector<16x32xbf16>
    %c0_38 = arith.constant 0 : index
    %c0_39 = arith.constant 0 : index
    %c0_40 = arith.constant 0 : index
    %101 = vector.load %arg7[%c0_38, %c0_39, %c0_40] : memref<1x32x64xbf16, #tpu.memory_space<vmem>>, vector<1x32x64xbf16>
    %102 = vector.shape_cast %101 : vector<1x32x64xbf16> to vector<32x64xbf16>
    %cst_41 = arith.constant dense<0.000000e+00> : vector<16x64xf32>
    %103 = tpu.matmul %100, %102, %cst_41 {dimension_numbers = #tpu.dot_dimension_numbers<[1], [0], [0], [1], [0, 0, 1, 1], [], []>} : vector<16x32xbf16>, vector<32x64xbf16>, vector<16x64xf32> -> vector<16x64xf32>
    %104 = vector.broadcast %16 : vector<1x64xf32> to vector<16x64xf32>
    %105 = arith.addf %103, %104 : vector<16x64xf32>
    %cst_42 = arith.constant 5.000000e-01 : f32
    %106 = vector.broadcast %cst_42 : f32 to vector<16x64xf32>
    %107 = arith.mulf %106, %105 : vector<16x64xf32>
    %cst_43 = arith.constant 4.471500e-02 : f32
    %108 = vector.broadcast %cst_43 : f32 to vector<16x64xf32>
    %109 = arith.mulf %108, %105 : vector<16x64xf32>
    %110 = arith.mulf %109, %105 : vector<16x64xf32>
    %111 = arith.mulf %110, %105 : vector<16x64xf32>
    %112 = arith.addf %105, %111 : vector<16x64xf32>
    %cst_44 = arith.constant 0.797884583 : f32
    %113 = vector.broadcast %cst_44 : f32 to vector<16x64xf32>
    %114 = arith.mulf %113, %112 : vector<16x64xf32>
    %115 = math.tanh %114 : vector<16x64xf32>
    %cst_45 = arith.constant 1.000000e+00 : f32
    %116 = vector.broadcast %cst_45 : f32 to vector<16x64xf32>
    %117 = arith.addf %116, %115 : vector<16x64xf32>
    %118 = arith.mulf %107, %117 : vector<16x64xf32>
    %119 = arith.truncf %118 : vector<16x64xf32> to vector<16x64xbf16>
    %c0_46 = arith.constant 0 : index
    %c0_47 = arith.constant 0 : index
    %c0_48 = arith.constant 0 : index
    %120 = vector.load %arg8[%c0_46, %c0_47, %c0_48] : memref<1x64x32xbf16, #tpu.memory_space<vmem>>, vector<1x64x32xbf16>
    %121 = vector.shape_cast %120 : vector<1x64x32xbf16> to vector<64x32xbf16>
    %cst_49 = arith.constant dense<0.000000e+00> : vector<16x32xf32>
    %122 = tpu.matmul %119, %121, %cst_49 {dimension_numbers = #tpu.dot_dimension_numbers<[1], [0], [0], [1], [0, 0, 1, 1], [], []>} : vector<16x64xbf16>, vector<64x32xbf16>, vector<16x32xf32> -> vector<16x32xf32>
    %123 = vector.broadcast %14 : vector<1x32xf32> to vector<16x32xf32>
    %124 = arith.addf %122, %123 : vector<16x32xf32>
    %125 = arith.addf %79, %124 : vector<16x32xf32>
    %c0_50 = arith.constant 0 : index
    %c0_51 = arith.constant 0 : index
    %126 = vector.load %arg10[%c0_50, %c0_51] : memref<16x32xf32, #tpu.memory_space<vmem>>, vector<16x32xf32>
    tpu.vector_store %arg10[%c0_50, %c0_51], %125 {strides = array<i32>} : memref<16x32xf32, #tpu.memory_space<vmem>>, vector<16x32xf32>,
    %c1_i32 = arith.constant 1 : i32
    %127 = arith.cmpi eq, %arg1, %c1_i32 : i32
    %128 = arith.extui %127 : i1 to i32
    %c0_i32_52 = arith.constant 0 : i32
    %129 = arith.cmpi ne, %128, %c0_i32_52 : i32
    scf.if %129 {
      %130 = vector.shape_cast %125 : vector<16x32xf32> to vector<2x8x32xf32>
      %cst_53 = arith.constant dense<0.000000e+00> : vector<2x32xf32>
      %131 = vector.multi_reduction <add>, %130, %cst_53 [1] : vector<2x8x32xf32> to vector<2x32xf32>
      %cst_54 = arith.constant 1.250000e-01 : f32
      %132 = vector.broadcast %cst_54 : f32 to vector<2x32xf32>
      %133 = arith.mulf %131, %132 : vector<2x32xf32>
      %cst_55 = arith.constant 0.000000e+00 : f32
      %134 = vector.broadcast %cst_55 : f32 to vector<2x96xf32>
      %135 = tpu.concatenate %133, %134 in 1 : vector<2x32xf32>, vector<2x96xf32> -> vector<2x128xf32>
      %c0_56 = arith.constant 0 : index
      %c0_57 = arith.constant 0 : index
      %136 = vector.load %arg9[%c0_56, %c0_57] : memref<2x128xf32, #tpu.memory_space<vmem>>, vector<2x128xf32>
      tpu.vector_store %arg9[%c0_56, %c0_57], %135 {strides = array<i32>} : memref<2x128xf32, #tpu.memory_space<vmem>>, vector<2x128xf32>,
    } else {
    }
    return
  }
  func.func @transform_0(%arg0: i32, %arg1: i32) -> (i32, i32, i32) {
    %c0_i32 = arith.constant 0 : i32
    %c0_i32_0 = arith.constant 0 : i32
    %c0_i32_1 = arith.constant 0 : i32
    return %arg0, %c0_i32, %c0_i32_0 : i32, i32, i32
  }
  func.func @transform_1(%arg0: i32, %arg1: i32) -> (i32, i32, i32) {
    %c0_i32 = arith.constant 0 : i32
    %c0_i32_0 = arith.constant 0 : i32
    %c0_i32_1 = arith.constant 0 : i32
    %c0_i32_2 = arith.constant 0 : i32
    return %c0_i32, %c0_i32_0, %c0_i32_1 : i32, i32, i32
  }
  func.func @transform_2(%arg0: i32, %arg1: i32) -> (i32, i32, i32) {
    %c0_i32 = arith.constant 0 : i32
    %c0_i32_0 = arith.constant 0 : i32
    %c0_i32_1 = arith.constant 0 : i32
    return %arg1, %c0_i32, %c0_i32_0 : i32, i32, i32
  }
  func.func @transform_3(%arg0: i32, %arg1: i32) -> (i32, i32, i32) {
    %c0_i32 = arith.constant 0 : i32
    %c0_i32_0 = arith.constant 0 : i32
    %c0_i32_1 = arith.constant 0 : i32
    return %arg1, %c0_i32, %c0_i32_0 : i32, i32, i32
  }
  func.func @transform_4(%arg0: i32, %arg1: i32) -> (i32, i32, i32) {
    %c0_i32 = arith.constant 0 : i32
    %c0_i32_0 = arith.constant 0 : i32
    %c0_i32_1 = arith.constant 0 : i32
    return %arg1, %c0_i32, %c0_i32_0 : i32, i32, i32
  }
  func.func @transform_5(%arg0: i32, %arg1: i32) -> (i32, i32, i32) {
    %c0_i32 = arith.constant 0 : i32
    %c0_i32_0 = arith.constant 0 : i32
    %c0_i32_1 = arith.constant 0 : i32
    return %arg1, %c0_i32, %c0_i32_0 : i32, i32, i32
  }
  func.func @transform_6(%arg0: i32, %arg1: i32) -> (i32, i32, i32) {
    %c0_i32 = arith.constant 0 : i32
    %c0_i32_0 = arith.constant 0 : i32
    %c0_i32_1 = arith.constant 0 : i32
    return %arg1, %c0_i32, %c0_i32_0 : i32, i32, i32
  }
  func.func @transform_7(%arg0: i32, %arg1: i32) -> (i32, i32) {
    %c0_i32 = arith.constant 0 : i32
    %c0_i32_0 = arith.constant 0 : i32
    return %arg0, %c0_i32 : i32, i32
  }
}

</mosaic_0001>

<llo_original>
// kernel: tpu_custom_call.1
$region0: #{tpu_custom_call.1}
  #allocation0 [shape = 'u32[]', space=smem, size = 0x4, offset = 0x4, fixed_abs, tag = 'smem constant byte address 0x4 - core index']
  #allocation1 [shape = 'u32[144,128]{1,0:T(1,128)}', space=vmem, size = 0x12000, scoped, tag = 'internal scratch']
  #allocation2 [shape = 'f32[16,32]{1,0:T(8,128)}', space=vmem, size = 0x2000, scoped, tag = 'scratch operand']
  %s0 = inlined_call_operand.vmem [shape: f32[2,8,32], index: 0, kind: input, shape index: {}]
  %s1 = inlined_call_operand.vmem [shape: f32[1,8,32], index: 1, kind: input, shape index: {}]
  %s2 = inlined_call_operand.vmem [shape: f32[2,7,64], index: 2, kind: input, shape index: {}]
  %s3 = inlined_call_operand.vmem [shape: bf16[2,32,192], index: 3, kind: input, shape index: {}]
  %s4 = inlined_call_operand.vmem [shape: bf16[2,64,32], index: 4, kind: input, shape index: {}]
  %s5 = inlined_call_operand.vmem [shape: bf16[2,32,64], index: 5, kind: input, shape index: {}]
  %s6 = inlined_call_operand.vmem [shape: bf16[2,64,32], index: 6, kind: input, shape index: {}]
  %s7 = inlined_call_operand.hbm [shape: f32[2,128], index: 7, kind: output, shape index: {}]
  %s8 = sld [smem:[#allocation0]]
  $region69: #{tpu_custom_call.1} parent=0
    _
  %s10 = ssub.s32 1, %s8
  %s11 = scalar_select 0, %s10, %s8
  $region1: #{tpu_custom_call.1} parent=0
    #allocation3 [shape = 'u8[1024]{0}', space=vmem, size = 0x400, scoped, tag = 'output window, operand 0, single buffered']
    #allocation4 [shape = 's32[2]{0}', space=sflag, size = 0x8, scoped, tag = 'scoped memory for tpu_custom_call.1']
    %12 = vsyncpa [#allocation4], 0
    loop: start=0, step=1, limit=4
    $region2: #{tpu_custom_call.1} parent=1 // loop_pre_header
      _
    $region3: #{tpu_custom_call.1} parent=1 // loop_header
      %s14 = sphi 0, %s18
      %p15 = scmp.ge.s32.totalorder %s14, 4
      %s21 = sphi 0, %s33
      %s22 = sphi 0, %s29
      %s23 = sphi 0, %s21
      %s24 = sphi 0, %s22
      %s25 = sphi 0, %s23
      %s26 = sphi 0, %s24
      %s36 = sphi 0, %s38
      %s39 = sphi 0, %s36
      %s40 = sphi 0, %s39
      %s56 = sphi 0, %s40
      %s60 = sphi 0, %s60
      %s62 = sphi 0, %s60
      %s63 = sphi 0, %s62
      %s77 = sphi 0, %s63
      %s83 = sphi 0, %s85
      %s86 = sphi 0, %s83
      %s87 = sphi 0, %s86
      %s103 = sphi 0, %s87
      %s109 = sphi 0, %s111
      %s112 = sphi 0, %s109
      %s113 = sphi 0, %s112
      %s129 = sphi 0, %s113
      %s135 = sphi 0, %s137
      %s138 = sphi 0, %s135
      %s139 = sphi 0, %s138
      %s155 = sphi 0, %s139
      %s161 = sphi 0, %s163
      %s164 = sphi 0, %s161
      %s165 = sphi 0, %s164
      %s181 = sphi 0, %s165
      %s187 = sphi 0, %s189
      %s190 = sphi 0, %s187
      %s191 = sphi 0, %s190
      %s207 = sphi 0, %s191
      %s213 = sphi 0, %s215
      %s216 = sphi 0, %s213
      %s217 = sphi 0, %s216
      %s233 = sphi 0, %s217
    $region4: #{tpu_custom_call.1} parent=1 // loop_header_branch
      %17 = sbr.rel (%p15) target = $region8
    $region5: #{tpu_custom_call.1} parent=1 // loop_body
      %s19 = ssub.s32 %s14, 1
      %s20 = ssub.s32 %s14, 2
      %s27 = sadd.s32 1, %s22
      %p28 = scmp.ge.s32.totalorder %s27, 2
      %s29 = scalar_select %p28, 0, %s27
      %s30 = sadd.s32 1, %s21
      %s31 = scalar_select %p28, %s30, %s21
      %p32 = scmp.ge.s32.totalorder %s31, 1
      %s33 = scalar_select %p32, 0, %s31
      %s34 = ssub.s32 %s21, %s33
      %p35 = scmp.eq.s32.totalorder %s34, 0
      %s37 = sadd.s32 %s36, 1
      %s38 = scalar_select %p35, %s36, %s37
      %p41 = pneg %p35
      %p42 = scmp.eq.s32.totalorder %s14, 1
      %p43 = por %p41, %p42
      %p44 = scmp.ne.s32.totalorder %s36, %s39
      %p45 = scmp.eq.s32.totalorder %s14, 0
      %p46 = por %p44, %p45
      %p47 = scmp.ne.s32.totalorder %s36, %s39
      %p48 = scmp.eq.s32.totalorder %s19, 1
      %p49 = por %p47, %p48
      %p50 = scmp.ne.s32.totalorder %s39, %s40
      %p51 = scmp.eq.s32.totalorder %s19, 0
      %p52 = por %p50, %p51
      %p53 = scmp.ne.s32.totalorder %s39, %s40
      %p54 = scmp.eq.s32.totalorder %s20, 1
      %p55 = por %p53, %p54
      %p57 = scmp.ne.s32.totalorder %s40, %s56
      %p58 = scmp.eq.s32.totalorder %s20, 0
      %p59 = por %p57, %p58
      %s61 = sadd.s32 %s60, 1
      %p64 = scmp.eq.s32.totalorder %s14, 1
      %p65 = scmp.ne.s32.totalorder %s60, %s62
      %p66 = scmp.eq.s32.totalorder %s14, 0
      %p67 = por %p65, %p66
      %p68 = scmp.ne.s32.totalorder %s60, %s62
      %p69 = scmp.eq.s32.totalorder %s19, 1
      %p70 = por %p68, %p69
      %p71 = scmp.ne.s32.totalorder %s62, %s63
      %p72 = scmp.eq.s32.totalorder %s19, 0
      %p73 = por %p71, %p72
      %p74 = scmp.ne.s32.totalorder %s62, %s63
      %p75 = scmp.eq.s32.totalorder %s20, 1
      %p76 = por %p74, %p75
      %p78 = scmp.ne.s32.totalorder %s63, %s77
      %p79 = scmp.eq.s32.totalorder %s20, 0
      %p80 = por %p78, %p79
      %s81 = ssub.s32 %s22, %s29
      %p82 = scmp.eq.s32.totalorder %s81, 0
      %s84 = sadd.s32 %s83, 1
      %s85 = scalar_select %p82, %s83, %s84
      %p88 = pneg %p82
      %p89 = scmp.eq.s32.totalorder %s14, 1
      %p90 = por %p88, %p89
      %p91 = scmp.ne.s32.totalorder %s83, %s86
      %p92 = scmp.eq.s32.totalorder %s14, 0
      %p93 = por %p91, %p92
      %p94 = scmp.ne.s32.totalorder %s83, %s86
      %p95 = scmp.eq.s32.totalorder %s19, 1
      %p96 = por %p94, %p95
      %p97 = scmp.ne.s32.totalorder %s86, %s87
      %p98 = scmp.eq.s32.totalorder %s19, 0
      %p99 = por %p97, %p98
      %p100 = scmp.ne.s32.totalorder %s86, %s87
      %p101 = scmp.eq.s32.totalorder %s20, 1
      %p102 = por %p100, %p101
      %p104 = scmp.ne.s32.totalorder %s87, %s103
      %p105 = scmp.eq.s32.totalorder %s20, 0
      %p106 = por %p104, %p105
      %s107 = ssub.s32 %s22, %s29
      %p108 = scmp.eq.s32.totalorder %s107, 0
      %s110 = sadd.s32 %s109, 1
      %s111 = scalar_select %p108, %s109, %s110
      %p114 = pneg %p108
      %p115 = scmp.eq.s32.totalorder %s14, 1
      %p116 = por %p114, %p115
      %p117 = scmp.ne.s32.totalorder %s109, %s112
      %p118 = scmp.eq.s32.totalorder %s14, 0
      %p119 = por %p117, %p118
      %p120 = scmp.ne.s32.totalorder %s109, %s112
      %p121 = scmp.eq.s32.totalorder %s19, 1
      %p122 = por %p120, %p121
      %p123 = scmp.ne.s32.totalorder %s112, %s113
      %p124 = scmp.eq.s32.totalorder %s19, 0
      %p125 = por %p123, %p124
      %p126 = scmp.ne.s32.totalorder %s112, %s113
      %p127 = scmp.eq.s32.totalorder %s20, 1
      %p128 = por %p126, %p127
      %p130 = scmp.ne.s32.totalorder %s113, %s129
      %p131 = scmp.eq.s32.totalorder %s20, 0
      %p132 = por %p130, %p131
      %s133 = ssub.s32 %s22, %s29
      %p134 = scmp.eq.s32.totalorder %s133, 0
      %s136 = sadd.s32 %s135, 1
      %s137 = scalar_select %p134, %s135, %s136
      %p140 = pneg %p134
      %p141 = scmp.eq.s32.totalorder %s14, 1
      %p142 = por %p140, %p141
      %p143 = scmp.ne.s32.totalorder %s135, %s138
      %p144 = scmp.eq.s32.totalorder %s14, 0
      %p145 = por %p143, %p144
      %p146 = scmp.ne.s32.totalorder %s135, %s138
      %p147 = scmp.eq.s32.totalorder %s19, 1
      %p148 = por %p146, %p147
      %p149 = scmp.ne.s32.totalorder %s138, %s139
      %p150 = scmp.eq.s32.totalorder %s19, 0
      %p151 = por %p149, %p150
      %p152 = scmp.ne.s32.totalorder %s138, %s139
      %p153 = scmp.eq.s32.totalorder %s20, 1
      %p154 = por %p152, %p153
      %p156 = scmp.ne.s32.totalorder %s139, %s155
      %p157 = scmp.eq.s32.totalorder %s20, 0
      %p158 = por %p156, %p157
      %s159 = ssub.s32 %s22, %s29
      %p160 = scmp.eq.s32.totalorder %s159, 0
      %s162 = sadd.s32 %s161, 1
      %s163 = scalar_select %p160, %s161, %s162
      %p166 = pneg %p160
      %p167 = scmp.eq.s32.totalorder %s14, 1
      %p168 = por %p166, %p167
      %p169 = scmp.ne.s32.totalorder %s161, %s164
      %p170 = scmp.eq.s32.totalorder %s14, 0
      %p171 = por %p169, %p170
      %p172 = scmp.ne.s32.totalorder %s161, %s164
      %p173 = scmp.eq.s32.totalorder %s19, 1
      %p174 = por %p172, %p173
      %p175 = scmp.ne.s32.totalorder %s164, %s165
      %p176 = scmp.eq.s32.totalorder %s19, 0
      %p177 = por %p175, %p176
      %p178 = scmp.ne.s32.totalorder %s164, %s165
      %p179 = scmp.eq.s32.totalorder %s20, 1
      %p180 = por %p178, %p179
      %p182 = scmp.ne.s32.totalorder %s165, %s181
      %p183 = scmp.eq.s32.totalorder %s20, 0
      %p184 = por %p182, %p183
      %s185 = ssub.s32 %s22, %s29
      %p186 = scmp.eq.s32.totalorder %s185, 0
      %s188 = sadd.s32 %s187, 1
      %s189 = scalar_select %p186, %s187, %s188
      %p192 = pneg %p186
      %p193 = scmp.eq.s32.totalorder %s14, 1
      %p194 = por %p192, %p193
      %p195 = scmp.ne.s32.totalorder %s187, %s190
      %p196 = scmp.eq.s32.totalorder %s14, 0
      %p197 = por %p195, %p196
      %p198 = scmp.ne.s32.totalorder %s187, %s190
      %p199 = scmp.eq.s32.totalorder %s19, 1
      %p200 = por %p198, %p199
      %p201 = scmp.ne.s32.totalorder %s190, %s191
      %p202 = scmp.eq.s32.totalorder %s19, 0
      %p203 = por %p201, %p202
      %p204 = scmp.ne.s32.totalorder %s190, %s191
      %p205 = scmp.eq.s32.totalorder %s20, 1
      %p206 = por %p204, %p205
      %p208 = scmp.ne.s32.totalorder %s191, %s207
      %p209 = scmp.eq.s32.totalorder %s20, 0
      %p210 = por %p208, %p209
      %s211 = ssub.s32 %s21, %s33
      %p212 = scmp.eq.s32.totalorder %s211, 0
      %s214 = sadd.s32 %s213, 1
      %s215 = scalar_select %p212, %s213, %s214
      %p218 = pneg %p212
      %p219 = scmp.eq.s32.totalorder %s14, 1
      %p220 = por %p218, %p219
      %p221 = scmp.ne.s32.totalorder %s213, %s216
      %p222 = scmp.eq.s32.totalorder %s14, 0
      %p223 = por %p221, %p222
      %p224 = scmp.ne.s32.totalorder %s213, %s216
      %p225 = scmp.eq.s32.totalorder %s19, 1
      %p226 = por %p224, %p225
      %p227 = scmp.ne.s32.totalorder %s216, %s217
      %p228 = scmp.eq.s32.totalorder %s19, 0
      %p229 = por %p227, %p228
      %p230 = scmp.ne.s32.totalorder %s216, %s217
      %p231 = scmp.eq.s32.totalorder %s20, 1
      %p232 = por %p230, %p231
      %p234 = scmp.ne.s32.totalorder %s217, %s233
      %p235 = scmp.eq.s32.totalorder %s20, 0
      %p236 = por %p234, %p235
      %p237 = scmp.le.s32.totalorder 1, %s14
      %p238 = scmp.lt.s32.totalorder %s14, 3
      %p239 = pnand %p237, %p238
      %p240 = pneg %p239
      // Predicated region
      $region9: #{tpu_custom_call.1} parent=5 // pred_check
        _
      $region10: #{tpu_custom_call.1} parent=5 // pred_check_branch
        %242 = sbr.rel (%p239) target = $region12
      $region11: #{tpu_custom_call.1} parent=5 // pred_region
        %s243 = ssub.s32 %s14, 1
        // Predicated region
        $region13: #{tpu_custom_call.1} parent=11 // pred_check
          %p244 = pneg %p52
        $region14: #{tpu_custom_call.1} parent=11 // pred_check_branch
          %246 = sbr.rel (%p244) target = $region16
        $region15: #{tpu_custom_call.1} parent=11 // pred_region
          %s247 = smul.u32 2, %s23
          %p248 = scmp.lt.s32.totalorder %s247, 1
          %s249 = scalar_select %p248, %s247, 1
          %s250 = smul.addr %s249, 8
          %s251 = scalar_lea.vmem %s0, %s250
          %s252 = smul.u32 2, %s23
        $region16: #{tpu_custom_call.1} parent=11 // pred_fallthru
          _
        // Predicated region
        $region17: #{tpu_custom_call.1} parent=11 // pred_check
          %p253 = pneg %p73
        $region18: #{tpu_custom_call.1} parent=11 // pred_check_branch
          %255 = sbr.rel (%p253) target = $region20
        $region19: #{tpu_custom_call.1} parent=11 // pred_region
          _
        $region20: #{tpu_custom_call.1} parent=11 // pred_fallthru
          _
      $region12: #{tpu_custom_call.1} parent=5 // pred_fallthru
        _
      %p256 = scmp.lt.s32.totalorder %s14, 2
      // Predicated region
      $region21: #{tpu_custom_call.1} parent=5 // pred_check
        %p257 = pneg %p256
      $region22: #{tpu_custom_call.1} parent=5 // pred_check_branch
        %259 = sbr.rel (%p257) target = $region24
      $region23: #{tpu_custom_call.1} parent=5 // pred_region
        // Predicated region
        $region25: #{tpu_custom_call.1} parent=23 // pred_check
          %p260 = pneg %p93
        $region26: #{tpu_custom_call.1} parent=23 // pred_check_branch
          %262 = sbr.rel (%p260) target = $region28
        $region27: #{tpu_custom_call.1} parent=23 // pred_region
          %p263 = scmp.lt.s32.totalorder %s22, 1
          %s264 = scalar_select %p263, %s22, 1
          %s265 = smul.addr %s264, 8
          %s266 = scalar_lea.vmem %s2, %s265
        $region28: #{tpu_custom_call.1} parent=23 // pred_fallthru
          _
        // Predicated region
        $region29: #{tpu_custom_call.1} parent=23 // pred_check
          %p267 = pneg %p119
        $region30: #{tpu_custom_call.1} parent=23 // pred_check_branch
          %269 = sbr.rel (%p267) target = $region32
        $region31: #{tpu_custom_call.1} parent=23 // pred_region
          %p270 = scmp.lt.s32.totalorder %s22, 1
          %s271 = scalar_select %p270, %s22, 1
          %s272 = smul.addr %s271, 8
          %s273 = smul.addr %s272, 4
          %s274 = scalar_lea.vmem %s3, %s273
        $region32: #{tpu_custom_call.1} parent=23 // pred_fallthru
          _
        // Predicated region
        $region33: #{tpu_custom_call.1} parent=23 // pred_check
          %p275 = pneg %p145
        $region34: #{tpu_custom_call.1} parent=23 // pred_check_branch
          %277 = sbr.rel (%p275) target = $region36
        $region35: #{tpu_custom_call.1} parent=23 // pred_region
          %p278 = scmp.lt.s32.totalorder %s22, 1
          %s279 = scalar_select %p278, %s22, 1
          %s280 = smul.addr %s279, 8
          %s281 = smul.addr %s280, 4
          %s282 = scalar_lea.vmem %s4, %s281
        $region36: #{tpu_custom_call.1} parent=23 // pred_fallthru
          _
        // Predicated region
        $region37: #{tpu_custom_call.1} parent=23 // pred_check
          %p283 = pneg %p171
        $region38: #{tpu_custom_call.1} parent=23 // pred_check_branch
          %285 = sbr.rel (%p283) target = $region40
        $region39: #{tpu_custom_call.1} parent=23 // pred_region
          %p286 = scmp.lt.s32.totalorder %s22, 1
          %s287 = scalar_select %p286, %s22, 1
          %s288 = smul.addr %s287, 4
          %s289 = smul.addr %s288, 4
          %s290 = scalar_lea.vmem %s5, %s289
        $region40: #{tpu_custom_call.1} parent=23 // pred_fallthru
          _
        // Predicated region
        $region41: #{tpu_custom_call.1} parent=23 // pred_check
          %p291 = pneg %p197
        $region42: #{tpu_custom_call.1} parent=23 // pred_check_branch
          %293 = sbr.rel (%p291) target = $region44
        $region43: #{tpu_custom_call.1} parent=23 // pred_region
          %p294 = scmp.lt.s32.totalorder %s22, 1
          %s295 = scalar_select %p294, %s22, 1
          %s296 = smul.addr %s295, 8
          %s297 = smul.addr %s296, 4
          %s298 = scalar_lea.vmem %s6, %s297
        $region44: #{tpu_custom_call.1} parent=23 // pred_fallthru
          _
      $region24: #{tpu_custom_call.1} parent=5 // pred_fallthru
        _
      %p299 = scmp.le.s32.totalorder 1, %s14
      %p300 = scmp.lt.s32.totalorder %s14, 3
      %p301 = pnand %p299, %p300
      %p302 = pneg %p301
      // Predicated region
      $region45: #{tpu_custom_call.1} parent=5 // pred_check
        _
      $region46: #{tpu_custom_call.1} parent=5 // pred_check_branch
        %304 = sbr.rel (%p301) target = $region48
      $region47: #{tpu_custom_call.1} parent=5 // pred_region
        %s305 = ssub.s32 %s14, 1
        %s306 = smul.u32 2, %s23
        %p307 = scmp.lt.s32.totalorder %s306, 1
        %s308 = scalar_select %p307, %s306, 1
        %s309 = smul.addr %s308, 8
        %s310 = scalar_lea.vmem %s0, %s309
        %p311 = pneg %p52
        %p312 = pneg %p49
        %p313 = pneg %p73
        %p314 = pneg %p70
        %p315 = scmp.lt.s32.totalorder %s24, 1
        %s316 = scalar_select %p315, %s24, 1
        %s317 = smul.addr %s316, 8
        %s318 = scalar_lea.vmem %s2, %s317
        %p319 = pneg %p99
        %p320 = pneg %p96
        %p321 = scmp.lt.s32.totalorder %s24, 1
        %s322 = scalar_select %p321, %s24, 1
        %s323 = smul.addr %s322, 8
        %s324 = smul.addr %s323, 4
        %s325 = scalar_lea.vmem %s3, %s324
        %p326 = pneg %p125
        %p327 = pneg %p122
        %p328 = scmp.lt.s32.totalorder %s24, 1
        %s329 = scalar_select %p328, %s24, 1
        %s330 = smul.addr %s329, 8
        %s331 = smul.addr %s330, 4
        %s332 = scalar_lea.vmem %s4, %s331
        %p333 = pneg %p151
        %p334 = pneg %p148
        %p335 = scmp.lt.s32.totalorder %s24, 1
        %s336 = scalar_select %p335, %s24, 1
        %s337 = smul.addr %s336, 4
        %s338 = smul.addr %s337, 4
        %s339 = scalar_lea.vmem %s5, %s338
        %p340 = pneg %p177
        %p341 = pneg %p174
        %p342 = scmp.lt.s32.totalorder %s24, 1
        %s343 = scalar_select %p342, %s24, 1
        %s344 = smul.addr %s343, 8
        %s345 = smul.addr %s344, 4
        %s346 = scalar_lea.vmem %s6, %s345
        %p347 = pneg %p203
        %p348 = pneg %p200
        %p349 = pneg %p229
        %p350 = pneg %p226
        %s351 = smul.u32 2, %s23
        %p352 = scmp.lt.s32.totalorder %s351, 1
        %s353 = scalar_select %p352, %s351, 1
        %s354 = smul.addr %s353, 8
        %s355 = scalar_lea.vmem %s0, %s354
        %s356 = smul.u32 2, %s23
        %p357 = scmp.lt.s32.totalorder %s24, 1
        %s358 = scalar_select %p357, %s24, 1
        %s359 = smul.addr %s358, 8
        %s360 = scalar_lea.vmem %s2, %s359
        %p361 = scmp.lt.s32.totalorder %s24, 1
        %s362 = scalar_select %p361, %s24, 1
        %s363 = smul.addr %s362, 8
        %s364 = smul.addr %s363, 4
        %s365 = scalar_lea.vmem %s3, %s364
        %p366 = scmp.lt.s32.totalorder %s24, 1
        %s367 = scalar_select %p366, %s24, 1
        %s368 = smul.addr %s367, 8
        %s369 = smul.addr %s368, 4
        %s370 = scalar_lea.vmem %s4, %s369
        %p371 = scmp.lt.s32.totalorder %s24, 1
        %s372 = scalar_select %p371, %s24, 1
        %s373 = smul.addr %s372, 4
        %s374 = smul.addr %s373, 4
        %s375 = scalar_lea.vmem %s5, %s374
        %p376 = scmp.lt.s32.totalorder %s24, 1
        %s377 = scalar_select %p376, %s24, 1
        %s378 = smul.addr %s377, 8
        %s379 = smul.addr %s378, 4
        %s380 = scalar_lea.vmem %s6, %s379
        %p382 = scmp.eq.s32.totalorder %s24, 0
        // Predicated region
        $region49: #{tpu_custom_call.1} parent=47 // pred_check
          %p383 = pneg %p382
        $region50: #{tpu_custom_call.1} parent=47 // pred_check_branch
          %385 = sbr.rel (%p383) target = $region52
        $region51: #{tpu_custom_call.1} parent=47 // pred_region
          %v386 = vld [vmem:[%s355] sm:$0xff]
          %v387 = vld [vmem:[%s355 + $0x8] sm:$0xff]
          %v388 = vld [vmem:[%s1] sm:$0xff]
          %v389 = vadd.f32 %v386, %v388
          %v390 = vadd.f32 %v387, %v388
          %vm391 = vcmask 261120
          %392 = vst.msk [vmem:[#allocation2] sm:$0xff] %vm391, %v389
          %393 = vst.msk [vmem:[#allocation2 + $0x8] sm:$0xff] %vm391, %v390
        $region52: #{tpu_custom_call.1} parent=47 // pred_fallthru
          _
        %v394 = vld [vmem:[%s360] sm:$0x1]
        %v395 = vld [vmem:[%s360 + $0x1] sm:$0x1]
        %v396 = vld [vmem:[%s360 + $0x2] sm:$0x1]
        %v397 = vld [vmem:[%s360 + $0x3] sm:$0x1]
        %v398 = vld [vmem:[%s360 + $0x4] sm:$0x1]
        %v399 = vld [vmem:[%s360 + $0x5] sm:$0x1]
        %v400 = vld [vmem:[%s360 + $0x6] sm:$0x1]
        %v401 = vld [vmem:[#allocation2] sm:$0xff]
        %v402 = vld [vmem:[#allocation2 + $0x8] sm:$0xff]
        %vm403 = vcmask 261120
        %v404 = vsel %vm403, %v401, 0.0
        %405 = vadd.xlane.f32.xlu0 %v404
        %v406 = vpop.xlane.xlu0 %405
        %v407 = vsel %vm403, %v402, 0.0
        %408 = vadd.xlane.f32.xlu0 %v407
        %v409 = vpop.xlane.xlu0 %408
        %v410 = vrcp.pop 32.0
        %v411 = vmul.f32 %v406, %v410
        %v412 = vmul.f32 %v409, %v410
        %v413 = vsub.f32 %v401, %v411
        %v414 = vsub.f32 %v402, %v412
        %v415 = vmul.f32 %v413, %v413
        %v416 = vmul.f32 %v414, %v414
        %v417 = vsel %vm403, %v415, 0.0
        %418 = vadd.xlane.f32.xlu0 %v417
        %v419 = vpop.xlane.xlu0 %418
        %v420 = vsel %vm403, %v416, 0.0
        %421 = vadd.xlane.f32.xlu0 %v420
        %v422 = vpop.xlane.xlu0 %421
        %v423 = vmul.f32 %v419, %v410
        %v424 = vmul.f32 %v422, %v410
        %v425 = vadd.f32 %v423, 1e-05
        %v426 = vadd.f32 %v424, 1e-05
        %v427 = vrsqrt.pop %v425
        %v428 = vrsqrt.pop %v426
        %v429 = vmul.f32 %v413, %v427
        %v430 = vmul.f32 %v414, %v428
        %v431 = vlaneseq
        %v432 = vshrl.u32 %v431, 7
        %v433 = vsub.s32 0, %v432
        %v434 = vrot.slane %v394, %v433
        %v435 = vmul.f32 %v429, %v434
        %v436 = vmul.f32 %v430, %v434
        %v437 = vlaneseq
        %v438 = vshrl.u32 %v437, 7
        %v439 = vsub.s32 0, %v438
        %v440 = vrot.slane %v395, %v439
        %v441 = vadd.f32 %v435, %v440
        %v442 = vadd.f32 %v436, %v440
        %v443 = vpack.c.bf16 %v442, %v441
        %v444 = vld [vmem:[%s365] sm:$0xff]
        %v445 = vld [vmem:[%s365 + $0x8] sm:$0xff]
        %v446 = vld [vmem:[%s365 + $0x10] sm:$0xff]
        %v447 = vld [vmem:[%s365 + $0x18] sm:$0xff]
        %v452 = vunpack.c.l.b16 %v444
        %v453 = vunpack.c.h.b16 %v444
        %v454 = vunpack.c.l.b16 %v445
        %v455 = vunpack.c.h.b16 %v445
        %v456 = vunpack.c.l.b16 %v446
        %v457 = vunpack.c.h.b16 %v446
        %v458 = vunpack.c.l.b16 %v447
        %v459 = vunpack.c.h.b16 %v447
        %v460 = vpack.c.b16 %v454, %v452
        %v461 = vpack.c.b16 %v455, %v453
        %v462 = vpack.c.b16 %v458, %v456
        %v463 = vpack.c.b16 %v459, %v457
        %v469 = vsel %vm403, %v443, 0
        %471 = vmatprep.subr.bf16.mxu0 %v461
        %472 = vmatpush1.bf16.msra.mxu0 %v460
        %473 = vmatprep.subr.bf16.mxu0 %v463
        %474 = vmatpush1.bf16.msra.mxu0 %v462
        %475 = vmatprep.subr.bf16.mxu0 0
        %476 = vmatpush1.bf16.msra.mxu0 0
        %477 = vmatprep.subr.bf16.mxu0 0
        %478 = vmatpush1.bf16.msra.mxu0 0
        %479 = vmatprep.subr.bf16.mxu0 0
        %480 = vmatpush1.bf16.msra.mxu0 0
        %481 = vmatprep.subr.bf16.mxu0 0
        %482 = vmatpush1.bf16.msra.mxu0 0
        %483 = vmatprep.subr.bf16.mxu0 0
        %484 = vmatpush1.bf16.msra.mxu0 0
        %485 = vmatprep.subr.bf16.mxu0 0
        %486 = vmatpush1.bf16.msra.mxu0 0
        %487 = vmatprep.subr.bf16.mxu0 0
        %488 = vmatpush1.bf16.msra.mxu0 0
        %489 = vmatprep.subr.bf16.mxu0 0
        %490 = vmatpush1.bf16.msra.mxu0 0
        %491 = vmatprep.subr.bf16.mxu0 0
        %492 = vmatpush1.bf16.msra.mxu0 0
        %493 = vmatprep.subr.bf16.mxu0 0
        %494 = vmatpush1.bf16.msra.mxu0 0
        %495 = vmatprep.subr.bf16.mxu0 0
        %496 = vmatpush1.bf16.msra.mxu0 0
        %497 = vmatprep.subr.bf16.mxu0 0
        %498 = vmatpush1.bf16.msra.mxu0 0
        %499 = vmatprep.subr.bf16.mxu0 0
        %500 = vmatpush1.bf16.msra.mxu0 0
        %501 = vmatprep.subr.bf16.mxu0 0
        %502 = vmatpush1.bf16.msra.mxu0 0
        %503 = vmatprep.mubr.bf16.mxu0 0
        %504 = vmatmul.mubr.bf16.gmra.mrb[0].mxu0 %v469
        %v505 = vpop.f32.mrb[0].mxu0
        %v506 = vadd.f32 0.0, %v505
        %v507 = vpop.f32.mrb[0].mxu0
        %v508 = vadd.f32 0.0, %v507
        %v509 = vpop.f32.mrb[0].mxu0
        %v510 = vadd.f32 0.0, %v509
        %v511 = vpop.f32.mrb[0].mxu0
        %v512 = vadd.f32 0.0, %v511
        %513 = vdwg.mxu0
        %516 = vrot.lane.b32.xlu0 %v506, 112
        %v517 = vpop.permute.xlu0 %516
        %518 = vrot.lane.b32.xlu0 %v510, 112
        %v519 = vpop.permute.xlu0 %518
        %522 = vrot.lane.b32.xlu0 %v506, 96
        %v523 = vpop.permute.xlu0 %522
        %524 = vrot.lane.b32.xlu0 %v510, 96
        %v525 = vpop.permute.xlu0 %524
        %528 = vrot.lane.b32.xlu0 %v506, 80
        %v529 = vpop.permute.xlu0 %528
        %530 = vrot.lane.b32.xlu0 %v510, 80
        %v531 = vpop.permute.xlu0 %530
        %v534 = vcombine.low %v506, %v523
        %v535 = vcombine.high %v506, %v523
        %v537 = vunpack.c.l.s4 1983009808
        %v538 = vunpack.c.0.s8 %v537
        %v539 = vlaneseq
        %v540 = vshrl.u32 %v539, 7
        %v541 = vsub.s32 %v538, %v540
        %v542 = vrot.slane %v534, %v541
        %v544 = vunpack.c.l.s4 1983009808
        %v545 = vunpack.c.0.s8 %v544
        %v546 = vlaneseq
        %v547 = vshrl.u32 %v546, 7
        %v548 = vsub.s32 %v545, %v547
        %v549 = vrot.slane %v535, %v548
        %v550 = vcombine.low %v517, %v529
        %v551 = vcombine.high %v517, %v529
        %v553 = vunpack.c.l.s4 1983009808
        %v554 = vunpack.c.0.s8 %v553
        %v555 = vlaneseq
        %v556 = vshrl.u32 %v555, 7
        %v557 = vsub.s32 %v554, %v556
        %v558 = vrot.slane %v550, %v557
        %v560 = vunpack.c.l.s4 1983009808
        %v561 = vunpack.c.0.s8 %v560
        %v562 = vlaneseq
        %v563 = vshrl.u32 %v562, 7
        %v564 = vsub.s32 %v561, %v563
        %v565 = vrot.slane %v551, %v564
        %v566 = vcombine.low %v542, %v558
        %v567 = vcombine.high %v542, %v558
        %v569 = vunpack.c.l.s4 1934713408
        %v570 = vunpack.c.0.s8 %v569
        %v571 = vlaneseq
        %v572 = vshrl.u32 %v571, 7
        %v573 = vsub.s32 %v570, %v572
        %v574 = vrot.slane %v566, %v573
        %v576 = vunpack.c.l.s4 1934713408
        %v577 = vunpack.c.0.s8 %v576
        %v578 = vlaneseq
        %v579 = vshrl.u32 %v578, 7
        %v580 = vsub.s32 %v577, %v579
        %v581 = vrot.slane %v567, %v580
        %v582 = vcombine.low %v549, %v565
        %v583 = vcombine.high %v549, %v565
        %v585 = vunpack.c.l.s4 1934713408
        %v586 = vunpack.c.0.s8 %v585
        %v587 = vlaneseq
        %v588 = vshrl.u32 %v587, 7
        %v589 = vsub.s32 %v586, %v588
        %v590 = vrot.slane %v582, %v589
        %v592 = vunpack.c.l.s4 1934713408
        %v593 = vunpack.c.0.s8 %v592
        %v594 = vlaneseq
        %v595 = vshrl.u32 %v594, 7
        %v596 = vsub.s32 %v593, %v595
        %v597 = vrot.slane %v583, %v596
        %v598 = vcombine.high %v574, 0.0
        %v599 = vcombine.high %v581, 0.0
        %v600 = vcombine.high %v590, 0.0
        %v601 = vcombine.high %v597, 0.0
        %v602 = vcombine.low %v510, %v525
        %v603 = vcombine.high %v510, %v525
        %v605 = vunpack.c.l.s4 1983009808
        %v606 = vunpack.c.0.s8 %v605
        %v607 = vlaneseq
        %v608 = vshrl.u32 %v607, 7
        %v609 = vsub.s32 %v606, %v608
        %v610 = vrot.slane %v602, %v609
        %v612 = vunpack.c.l.s4 1983009808
        %v613 = vunpack.c.0.s8 %v612
        %v614 = vlaneseq
        %v615 = vshrl.u32 %v614, 7
        %v616 = vsub.s32 %v613, %v615
        %v617 = vrot.slane %v603, %v616
        %v618 = vcombine.low %v519, %v531
        %v619 = vcombine.high %v519, %v531
        %v621 = vunpack.c.l.s4 1983009808
        %v622 = vunpack.c.0.s8 %v621
        %v623 = vlaneseq
        %v624 = vshrl.u32 %v623, 7
        %v625 = vsub.s32 %v622, %v624
        %v626 = vrot.slane %v618, %v625
        %v628 = vunpack.c.l.s4 1983009808
        %v629 = vunpack.c.0.s8 %v628
        %v630 = vlaneseq
        %v631 = vshrl.u32 %v630, 7
        %v632 = vsub.s32 %v629, %v631
        %v633 = vrot.slane %v619, %v632
        %v634 = vcombine.low %v610, %v626
        %v635 = vcombine.high %v610, %v626
        %v637 = vunpack.c.l.s4 1934713408
        %v638 = vunpack.c.0.s8 %v637
        %v639 = vlaneseq
        %v640 = vshrl.u32 %v639, 7
        %v641 = vsub.s32 %v638, %v640
        %v642 = vrot.slane %v634, %v641
        %v644 = vunpack.c.l.s4 1934713408
        %v645 = vunpack.c.0.s8 %v644
        %v646 = vlaneseq
        %v647 = vshrl.u32 %v646, 7
        %v648 = vsub.s32 %v645, %v647
        %v649 = vrot.slane %v635, %v648
        %v650 = vcombine.low %v617, %v633
        %v651 = vcombine.high %v617, %v633
        %v653 = vunpack.c.l.s4 1934713408
        %v654 = vunpack.c.0.s8 %v653
        %v655 = vlaneseq
        %v656 = vshrl.u32 %v655, 7
        %v657 = vsub.s32 %v654, %v656
        %v658 = vrot.slane %v650, %v657
        %v660 = vunpack.c.l.s4 1934713408
        %v661 = vunpack.c.0.s8 %v660
        %v662 = vlaneseq
        %v663 = vshrl.u32 %v662, 7
        %v664 = vsub.s32 %v661, %v663
        %v665 = vrot.slane %v651, %v664
        %v666 = vcombine.high %v642, 0.0
        %v667 = vcombine.high %v649, 0.0
        %v668 = vcombine.high %v658, 0.0
        %v669 = vcombine.high %v665, 0.0
        %v670 = vcombine.low %v574, %v581
        %v672 = vunpack.c.l.s4 1983009808
        %v673 = vunpack.c.0.s8 %v672
        %v674 = vlaneseq
        %v675 = vshrl.u32 %v674, 7
        %v676 = vsub.s32 %v673, %v675
        %v677 = vrot.slane %v670, %v676
        %v678 = vcombine.low %v598, %v599
        %v680 = vunpack.c.l.s4 1983009808
        %v681 = vunpack.c.0.s8 %v680
        %v682 = vlaneseq
        %v683 = vshrl.u32 %v682, 7
        %v684 = vsub.s32 %v681, %v683
        %v685 = vrot.slane %v678, %v684
        %v686 = vcombine.low %v590, %v597
        %v688 = vunpack.c.l.s4 1983009808
        %v689 = vunpack.c.0.s8 %v688
        %v690 = vlaneseq
        %v691 = vshrl.u32 %v690, 7
        %v692 = vsub.s32 %v689, %v691
        %v693 = vrot.slane %v686, %v692
        %v694 = vcombine.low %v600, %v601
        %v696 = vunpack.c.l.s4 1983009808
        %v697 = vunpack.c.0.s8 %v696
        %v698 = vlaneseq
        %v699 = vshrl.u32 %v698, 7
        %v700 = vsub.s32 %v697, %v699
        %v701 = vrot.slane %v694, %v700
        %v702 = vcombine.low %v677, %v685
        %v703 = vcombine.high %v677, %v685
        %v705 = vunpack.c.l.s4 1934713408
        %v706 = vunpack.c.0.s8 %v705
        %v707 = vlaneseq
        %v708 = vshrl.u32 %v707, 7
        %v709 = vsub.s32 %v706, %v708
        %v710 = vrot.slane %v702, %v709
        %v712 = vunpack.c.l.s4 1934713408
        %v713 = vunpack.c.0.s8 %v712
        %v714 = vlaneseq
        %v715 = vshrl.u32 %v714, 7
        %v716 = vsub.s32 %v713, %v715
        %v717 = vrot.slane %v703, %v716
        %v718 = vcombine.low %v693, %v701
        %v719 = vcombine.high %v693, %v701
        %v721 = vunpack.c.l.s4 1934713408
        %v722 = vunpack.c.0.s8 %v721
        %v723 = vlaneseq
        %v724 = vshrl.u32 %v723, 7
        %v725 = vsub.s32 %v722, %v724
        %v726 = vrot.slane %v718, %v725
        %v728 = vunpack.c.l.s4 1934713408
        %v729 = vunpack.c.0.s8 %v728
        %v730 = vlaneseq
        %v731 = vshrl.u32 %v730, 7
        %v732 = vsub.s32 %v729, %v731
        %v733 = vrot.slane %v719, %v732
        %v734 = vcombine.low %v710, %v726
        %v735 = vcombine.high %v710, %v726
        %v736 = vcombine.low %v717, %v733
        %v737 = vcombine.high %v717, %v733
        %v738 = vcombine.low %v642, %v649
        %v740 = vunpack.c.l.s4 1983009808
        %v741 = vunpack.c.0.s8 %v740
        %v742 = vlaneseq
        %v743 = vshrl.u32 %v742, 7
        %v744 = vsub.s32 %v741, %v743
        %v745 = vrot.slane %v738, %v744
        %v746 = vcombine.low %v666, %v667
        %v748 = vunpack.c.l.s4 1983009808
        %v749 = vunpack.c.0.s8 %v748
        %v750 = vlaneseq
        %v751 = vshrl.u32 %v750, 7
        %v752 = vsub.s32 %v749, %v751
        %v753 = vrot.slane %v746, %v752
        %v754 = vcombine.low %v658, %v665
        %v756 = vunpack.c.l.s4 1983009808
        %v757 = vunpack.c.0.s8 %v756
        %v758 = vlaneseq
        %v759 = vshrl.u32 %v758, 7
        %v760 = vsub.s32 %v757, %v759
        %v761 = vrot.slane %v754, %v760
        %v762 = vcombine.low %v668, %v669
        %v764 = vunpack.c.l.s4 1983009808
        %v765 = vunpack.c.0.s8 %v764
        %v766 = vlaneseq
        %v767 = vshrl.u32 %v766, 7
        %v768 = vsub.s32 %v765, %v767
        %v769 = vrot.slane %v762, %v768
        %v770 = vcombine.low %v745, %v753
        %v771 = vcombine.high %v745, %v753
        %v773 = vunpack.c.l.s4 1934713408
        %v774 = vunpack.c.0.s8 %v773
        %v775 = vlaneseq
        %v776 = vshrl.u32 %v775, 7
        %v777 = vsub.s32 %v774, %v776
        %v778 = vrot.slane %v770, %v777
        %v780 = vunpack.c.l.s4 1934713408
        %v781 = vunpack.c.0.s8 %v780
        %v782 = vlaneseq
        %v783 = vshrl.u32 %v782, 7
        %v784 = vsub.s32 %v781, %v783
        %v785 = vrot.slane %v771, %v784
        %v786 = vcombine.low %v761, %v769
        %v787 = vcombine.high %v761, %v769
        %v789 = vunpack.c.l.s4 1934713408
        %v790 = vunpack.c.0.s8 %v789
        %v791 = vlaneseq
        %v792 = vshrl.u32 %v791, 7
        %v793 = vsub.s32 %v790, %v792
        %v794 = vrot.slane %v786, %v793
        %v796 = vunpack.c.l.s4 1934713408
        %v797 = vunpack.c.0.s8 %v796
        %v798 = vlaneseq
        %v799 = vshrl.u32 %v798, 7
        %v800 = vsub.s32 %v797, %v799
        %v801 = vrot.slane %v787, %v800
        %v802 = vcombine.low %v778, %v794
        %v803 = vcombine.high %v778, %v794
        %v804 = vcombine.low %v785, %v801
        %v805 = vcombine.high %v785, %v801
        %806 = vrot.lane.b32.xlu0 %v506, 64
        %v807 = vpop.permute.xlu0 %806
        %808 = vrot.lane.b32.xlu0 %v510, 64
        %v809 = vpop.permute.xlu0 %808
        %810 = vrot.lane.b32.xlu0 %v517, 64
        %v811 = vpop.permute.xlu0 %810
        %812 = vrot.lane.b32.xlu0 %v519, 64
        %v813 = vpop.permute.xlu0 %812
        %814 = vrot.lane.b32.xlu0 %v523, 64
        %v815 = vpop.permute.xlu0 %814
        %816 = vrot.lane.b32.xlu0 %v525, 64
        %v817 = vpop.permute.xlu0 %816
        %818 = vrot.lane.b32.xlu0 %v529, 64
        %v819 = vpop.permute.xlu0 %818
        %820 = vrot.lane.b32.xlu0 %v531, 64
        %v821 = vpop.permute.xlu0 %820
        %v830 = vcombine.low %v807, %v815
        %v831 = vcombine.high %v807, %v815
        %v833 = vunpack.c.l.s4 1983009808
        %v834 = vunpack.c.0.s8 %v833
        %v835 = vlaneseq
        %v836 = vshrl.u32 %v835, 7
        %v837 = vsub.s32 %v834, %v836
        %v838 = vrot.slane %v830, %v837
        %v840 = vunpack.c.l.s4 1983009808
        %v841 = vunpack.c.0.s8 %v840
        %v842 = vlaneseq
        %v843 = vshrl.u32 %v842, 7
        %v844 = vsub.s32 %v841, %v843
        %v845 = vrot.slane %v831, %v844
        %v846 = vcombine.low %v811, %v819
        %v847 = vcombine.high %v811, %v819
        %v849 = vunpack.c.l.s4 1983009808
        %v850 = vunpack.c.0.s8 %v849
        %v851 = vlaneseq
        %v852 = vshrl.u32 %v851, 7
        %v853 = vsub.s32 %v850, %v852
        %v854 = vrot.slane %v846, %v853
        %v856 = vunpack.c.l.s4 1983009808
        %v857 = vunpack.c.0.s8 %v856
        %v858 = vlaneseq
        %v859 = vshrl.u32 %v858, 7
        %v860 = vsub.s32 %v857, %v859
        %v861 = vrot.slane %v847, %v860
        %v862 = vcombine.low %v838, %v854
        %v863 = vcombine.high %v838, %v854
        %v865 = vunpack.c.l.s4 1934713408
        %v866 = vunpack.c.0.s8 %v865
        %v867 = vlaneseq
        %v868 = vshrl.u32 %v867, 7
        %v869 = vsub.s32 %v866, %v868
        %v870 = vrot.slane %v862, %v869
        %v872 = vunpack.c.l.s4 1934713408
        %v873 = vunpack.c.0.s8 %v872
        %v874 = vlaneseq
        %v875 = vshrl.u32 %v874, 7
        %v876 = vsub.s32 %v873, %v875
        %v877 = vrot.slane %v863, %v876
        %v878 = vcombine.low %v845, %v861
        %v879 = vcombine.high %v845, %v861
        %v881 = vunpack.c.l.s4 1934713408
        %v882 = vunpack.c.0.s8 %v881
        %v883 = vlaneseq
        %v884 = vshrl.u32 %v883, 7
        %v885 = vsub.s32 %v882, %v884
        %v886 = vrot.slane %v878, %v885
        %v888 = vunpack.c.l.s4 1934713408
        %v889 = vunpack.c.0.s8 %v888
        %v890 = vlaneseq
        %v891 = vshrl.u32 %v890, 7
        %v892 = vsub.s32 %v889, %v891
        %v893 = vrot.slane %v879, %v892
        %v894 = vcombine.high %v870, 0.0
        %v895 = vcombine.high %v877, 0.0
        %v896 = vcombine.high %v886, 0.0
        %v897 = vcombine.high %v893, 0.0
        %v898 = vcombine.low %v809, %v817
        %v899 = vcombine.high %v809, %v817
        %v901 = vunpack.c.l.s4 1983009808
        %v902 = vunpack.c.0.s8 %v901
        %v903 = vlaneseq
        %v904 = vshrl.u32 %v903, 7
        %v905 = vsub.s32 %v902, %v904
        %v906 = vrot.slane %v898, %v905
        %v908 = vunpack.c.l.s4 1983009808
        %v909 = vunpack.c.0.s8 %v908
        %v910 = vlaneseq
        %v911 = vshrl.u32 %v910, 7
        %v912 = vsub.s32 %v909, %v911
        %v913 = vrot.slane %v899, %v912
        %v914 = vcombine.low %v813, %v821
        %v915 = vcombine.high %v813, %v821
        %v917 = vunpack.c.l.s4 1983009808
        %v918 = vunpack.c.0.s8 %v917
        %v919 = vlaneseq
        %v920 = vshrl.u32 %v919, 7
        %v921 = vsub.s32 %v918, %v920
        %v922 = vrot.slane %v914, %v921
        %v924 = vunpack.c.l.s4 1983009808
        %v925 = vunpack.c.0.s8 %v924
        %v926 = vlaneseq
        %v927 = vshrl.u32 %v926, 7
        %v928 = vsub.s32 %v925, %v927
        %v929 = vrot.slane %v915, %v928
        %v930 = vcombine.low %v906, %v922
        %v931 = vcombine.high %v906, %v922
        %v933 = vunpack.c.l.s4 1934713408
        %v934 = vunpack.c.0.s8 %v933
        %v935 = vlaneseq
        %v936 = vshrl.u32 %v935, 7
        %v937 = vsub.s32 %v934, %v936
        %v938 = vrot.slane %v930, %v937
        %v940 = vunpack.c.l.s4 1934713408
        %v941 = vunpack.c.0.s8 %v940
        %v942 = vlaneseq
        %v943 = vshrl.u32 %v942, 7
        %v944 = vsub.s32 %v941, %v943
        %v945 = vrot.slane %v931, %v944
        %v946 = vcombine.low %v913, %v929
        %v947 = vcombine.high %v913, %v929
        %v949 = vunpack.c.l.s4 1934713408
        %v950 = vunpack.c.0.s8 %v949
        %v951 = vlaneseq
        %v952 = vshrl.u32 %v951, 7
        %v953 = vsub.s32 %v950, %v952
        %v954 = vrot.slane %v946, %v953
        %v956 = vunpack.c.l.s4 1934713408
        %v957 = vunpack.c.0.s8 %v956
        %v958 = vlaneseq
        %v959 = vshrl.u32 %v958, 7
        %v960 = vsub.s32 %v957, %v959
        %v961 = vrot.slane %v947, %v960
        %v962 = vcombine.high %v938, 0.0
        %v963 = vcombine.high %v945, 0.0
        %v964 = vcombine.high %v954, 0.0
        %v965 = vcombine.high %v961, 0.0
        %v966 = vcombine.low %v870, %v877
        %v968 = vunpack.c.l.s4 1983009808
        %v969 = vunpack.c.0.s8 %v968
        %v970 = vlaneseq
        %v971 = vshrl.u32 %v970, 7
        %v972 = vsub.s32 %v969, %v971
        %v973 = vrot.slane %v966, %v972
        %v974 = vcombine.low %v894, %v895
        %v976 = vunpack.c.l.s4 1983009808
        %v977 = vunpack.c.0.s8 %v976
        %v978 = vlaneseq
        %v979 = vshrl.u32 %v978, 7
        %v980 = vsub.s32 %v977, %v979
        %v981 = vrot.slane %v974, %v980
        %v982 = vcombine.low %v886, %v893
        %v984 = vunpack.c.l.s4 1983009808
        %v985 = vunpack.c.0.s8 %v984
        %v986 = vlaneseq
        %v987 = vshrl.u32 %v986, 7
        %v988 = vsub.s32 %v985, %v987
        %v989 = vrot.slane %v982, %v988
        %v990 = vcombine.low %v896, %v897
        %v992 = vunpack.c.l.s4 1983009808
        %v993 = vunpack.c.0.s8 %v992
        %v994 = vlaneseq
        %v995 = vshrl.u32 %v994, 7
        %v996 = vsub.s32 %v993, %v995
        %v997 = vrot.slane %v990, %v996
        %v998 = vcombine.low %v973, %v981
        %v999 = vcombine.high %v973, %v981
        %v1001 = vunpack.c.l.s4 1934713408
        %v1002 = vunpack.c.0.s8 %v1001
        %v1003 = vlaneseq
        %v1004 = vshrl.u32 %v1003, 7
        %v1005 = vsub.s32 %v1002, %v1004
        %v1006 = vrot.slane %v998, %v1005
        %v1008 = vunpack.c.l.s4 1934713408
        %v1009 = vunpack.c.0.s8 %v1008
        %v1010 = vlaneseq
        %v1011 = vshrl.u32 %v1010, 7
        %v1012 = vsub.s32 %v1009, %v1011
        %v1013 = vrot.slane %v999, %v1012
        %v1014 = vcombine.low %v989, %v997
        %v1015 = vcombine.high %v989, %v997
        %v1017 = vunpack.c.l.s4 1934713408
        %v1018 = vunpack.c.0.s8 %v1017
        %v1019 = vlaneseq
        %v1020 = vshrl.u32 %v1019, 7
        %v1021 = vsub.s32 %v1018, %v1020
        %v1022 = vrot.slane %v1014, %v1021
        %v1024 = vunpack.c.l.s4 1934713408
        %v1025 = vunpack.c.0.s8 %v1024
        %v1026 = vlaneseq
        %v1027 = vshrl.u32 %v1026, 7
        %v1028 = vsub.s32 %v1025, %v1027
        %v1029 = vrot.slane %v1015, %v1028
        %v1030 = vcombine.low %v1006, %v1022
        %v1031 = vcombine.high %v1006, %v1022
        %v1032 = vcombine.low %v1013, %v1029
        %v1033 = vcombine.high %v1013, %v1029
        %v1034 = vcombine.low %v938, %v945
        %v1036 = vunpack.c.l.s4 1983009808
        %v1037 = vunpack.c.0.s8 %v1036
        %v1038 = vlaneseq
        %v1039 = vshrl.u32 %v1038, 7
        %v1040 = vsub.s32 %v1037, %v1039
        %v1041 = vrot.slane %v1034, %v1040
        %v1042 = vcombine.low %v962, %v963
        %v1044 = vunpack.c.l.s4 1983009808
        %v1045 = vunpack.c.0.s8 %v1044
        %v1046 = vlaneseq
        %v1047 = vshrl.u32 %v1046, 7
        %v1048 = vsub.s32 %v1045, %v1047
        %v1049 = vrot.slane %v1042, %v1048
        %v1050 = vcombine.low %v954, %v961
        %v1052 = vunpack.c.l.s4 1983009808
        %v1053 = vunpack.c.0.s8 %v1052
        %v1054 = vlaneseq
        %v1055 = vshrl.u32 %v1054, 7
        %v1056 = vsub.s32 %v1053, %v1055
        %v1057 = vrot.slane %v1050, %v1056
        %v1058 = vcombine.low %v964, %v965
        %v1060 = vunpack.c.l.s4 1983009808
        %v1061 = vunpack.c.0.s8 %v1060
        %v1062 = vlaneseq
        %v1063 = vshrl.u32 %v1062, 7
        %v1064 = vsub.s32 %v1061, %v1063
        %v1065 = vrot.slane %v1058, %v1064
        %v1066 = vcombine.low %v1041, %v1049
        %v1067 = vcombine.high %v1041, %v1049
        %v1069 = vunpack.c.l.s4 1934713408
        %v1070 = vunpack.c.0.s8 %v1069
        %v1071 = vlaneseq
        %v1072 = vshrl.u32 %v1071, 7
        %v1073 = vsub.s32 %v1070, %v1072
        %v1074 = vrot.slane %v1066, %v1073
        %v1076 = vunpack.c.l.s4 1934713408
        %v1077 = vunpack.c.0.s8 %v1076
        %v1078 = vlaneseq
        %v1079 = vshrl.u32 %v1078, 7
        %v1080 = vsub.s32 %v1077, %v1079
        %v1081 = vrot.slane %v1067, %v1080
        %v1082 = vcombine.low %v1057, %v1065
        %v1083 = vcombine.high %v1057, %v1065
        %v1085 = vunpack.c.l.s4 1934713408
        %v1086 = vunpack.c.0.s8 %v1085
        %v1087 = vlaneseq
        %v1088 = vshrl.u32 %v1087, 7
        %v1089 = vsub.s32 %v1086, %v1088
        %v1090 = vrot.slane %v1082, %v1089
        %v1092 = vunpack.c.l.s4 1934713408
        %v1093 = vunpack.c.0.s8 %v1092
        %v1094 = vlaneseq
        %v1095 = vshrl.u32 %v1094, 7
        %v1096 = vsub.s32 %v1093, %v1095
        %v1097 = vrot.slane %v1083, %v1096
        %v1098 = vcombine.low %v1074, %v1090
        %v1099 = vcombine.high %v1074, %v1090
        %v1100 = vcombine.low %v1081, %v1097
        %v1101 = vcombine.high %v1081, %v1097
        %1104 = vrot.lane.b32.xlu0 %v508, 112
        %v1105 = vpop.permute.xlu0 %1104
        %1106 = vrot.lane.b32.xlu0 %v512, 112
        %v1107 = vpop.permute.xlu0 %1106
        %1110 = vrot.lane.b32.xlu0 %v508, 96
        %v1111 = vpop.permute.xlu0 %1110
        %1112 = vrot.lane.b32.xlu0 %v512, 96
        %v1113 = vpop.permute.xlu0 %1112
        %1116 = vrot.lane.b32.xlu0 %v508, 80
        %v1117 = vpop.permute.xlu0 %1116
        %1118 = vrot.lane.b32.xlu0 %v512, 80
        %v1119 = vpop.permute.xlu0 %1118
        %v1122 = vcombine.low %v508, %v1111
        %v1123 = vcombine.high %v508, %v1111
        %v1125 = vunpack.c.l.s4 1983009808
        %v1126 = vunpack.c.0.s8 %v1125
        %v1127 = vlaneseq
        %v1128 = vshrl.u32 %v1127, 7
        %v1129 = vsub.s32 %v1126, %v1128
        %v1130 = vrot.slane %v1122, %v1129
        %v1132 = vunpack.c.l.s4 1983009808
        %v1133 = vunpack.c.0.s8 %v1132
        %v1134 = vlaneseq
        %v1135 = vshrl.u32 %v1134, 7
        %v1136 = vsub.s32 %v1133, %v1135
        %v1137 = vrot.slane %v1123, %v1136
        %v1138 = vcombine.low %v1105, %v1117
        %v1139 = vcombine.high %v1105, %v1117
        %v1141 = vunpack.c.l.s4 1983009808
        %v1142 = vunpack.c.0.s8 %v1141
        %v1143 = vlaneseq
        %v1144 = vshrl.u32 %v1143, 7
        %v1145 = vsub.s32 %v1142, %v1144
        %v1146 = vrot.slane %v1138, %v1145
        %v1148 = vunpack.c.l.s4 1983009808
        %v1149 = vunpack.c.0.s8 %v1148
        %v1150 = vlaneseq
        %v1151 = vshrl.u32 %v1150, 7
        %v1152 = vsub.s32 %v1149, %v1151
        %v1153 = vrot.slane %v1139, %v1152
        %v1154 = vcombine.low %v1130, %v1146
        %v1155 = vcombine.high %v1130, %v1146
        %v1157 = vunpack.c.l.s4 1934713408
        %v1158 = vunpack.c.0.s8 %v1157
        %v1159 = vlaneseq
        %v1160 = vshrl.u32 %v1159, 7
        %v1161 = vsub.s32 %v1158, %v1160
        %v1162 = vrot.slane %v1154, %v1161
        %v1164 = vunpack.c.l.s4 1934713408
        %v1165 = vunpack.c.0.s8 %v1164
        %v1166 = vlaneseq
        %v1167 = vshrl.u32 %v1166, 7
        %v1168 = vsub.s32 %v1165, %v1167
        %v1169 = vrot.slane %v1155, %v1168
        %v1170 = vcombine.low %v1137, %v1153
        %v1171 = vcombine.high %v1137, %v1153
        %v1173 = vunpack.c.l.s4 1934713408
        %v1174 = vunpack.c.0.s8 %v1173
        %v1175 = vlaneseq
        %v1176 = vshrl.u32 %v1175, 7
        %v1177 = vsub.s32 %v1174, %v1176
        %v1178 = vrot.slane %v1170, %v1177
        %v1180 = vunpack.c.l.s4 1934713408
        %v1181 = vunpack.c.0.s8 %v1180
        %v1182 = vlaneseq
        %v1183 = vshrl.u32 %v1182, 7
        %v1184 = vsub.s32 %v1181, %v1183
        %v1185 = vrot.slane %v1171, %v1184
        %v1186 = vcombine.high %v1162, 0.0
        %v1187 = vcombine.high %v1169, 0.0
        %v1188 = vcombine.high %v1178, 0.0
        %v1189 = vcombine.high %v1185, 0.0
        %v1190 = vcombine.low %v512, %v1113
        %v1191 = vcombine.high %v512, %v1113
        %v1193 = vunpack.c.l.s4 1983009808
        %v1194 = vunpack.c.0.s8 %v1193
        %v1195 = vlaneseq
        %v1196 = vshrl.u32 %v1195, 7
        %v1197 = vsub.s32 %v1194, %v1196
        %v1198 = vrot.slane %v1190, %v1197
        %v1200 = vunpack.c.l.s4 1983009808
        %v1201 = vunpack.c.0.s8 %v1200
        %v1202 = vlaneseq
        %v1203 = vshrl.u32 %v1202, 7
        %v1204 = vsub.s32 %v1201, %v1203
        %v1205 = vrot.slane %v1191, %v1204
        %v1206 = vcombine.low %v1107, %v1119
        %v1207 = vcombine.high %v1107, %v1119
        %v1209 = vunpack.c.l.s4 1983009808
        %v1210 = vunpack.c.0.s8 %v1209
        %v1211 = vlaneseq
        %v1212 = vshrl.u32 %v1211, 7
        %v1213 = vsub.s32 %v1210, %v1212
        %v1214 = vrot.slane %v1206, %v1213
        %v1216 = vunpack.c.l.s4 1983009808
        %v1217 = vunpack.c.0.s8 %v1216
        %v1218 = vlaneseq
        %v1219 = vshrl.u32 %v1218, 7
        %v1220 = vsub.s32 %v1217, %v1219
        %v1221 = vrot.slane %v1207, %v1220
        %v1222 = vcombine.low %v1198, %v1214
        %v1223 = vcombine.high %v1198, %v1214
        %v1225 = vunpack.c.l.s4 1934713408
        %v1226 = vunpack.c.0.s8 %v1225
        %v1227 = vlaneseq
        %v1228 = vshrl.u32 %v1227, 7
        %v1229 = vsub.s32 %v1226, %v1228
        %v1230 = vrot.slane %v1222, %v1229
        %v1232 = vunpack.c.l.s4 1934713408
        %v1233 = vunpack.c.0.s8 %v1232
        %v1234 = vlaneseq
        %v1235 = vshrl.u32 %v1234, 7
        %v1236 = vsub.s32 %v1233, %v1235
        %v1237 = vrot.slane %v1223, %v1236
        %v1238 = vcombine.low %v1205, %v1221
        %v1239 = vcombine.high %v1205, %v1221
        %v1241 = vunpack.c.l.s4 1934713408
        %v1242 = vunpack.c.0.s8 %v1241
        %v1243 = vlaneseq
        %v1244 = vshrl.u32 %v1243, 7
        %v1245 = vsub.s32 %v1242, %v1244
        %v1246 = vrot.slane %v1238, %v1245
        %v1248 = vunpack.c.l.s4 1934713408
        %v1249 = vunpack.c.0.s8 %v1248
        %v1250 = vlaneseq
        %v1251 = vshrl.u32 %v1250, 7
        %v1252 = vsub.s32 %v1249, %v1251
        %v1253 = vrot.slane %v1239, %v1252
        %v1254 = vcombine.high %v1230, 0.0
        %v1255 = vcombine.high %v1237, 0.0
        %v1256 = vcombine.high %v1246, 0.0
        %v1257 = vcombine.high %v1253, 0.0
        %v1258 = vcombine.low %v1162, %v1169
        %v1260 = vunpack.c.l.s4 1983009808
        %v1261 = vunpack.c.0.s8 %v1260
        %v1262 = vlaneseq
        %v1263 = vshrl.u32 %v1262, 7
        %v1264 = vsub.s32 %v1261, %v1263
        %v1265 = vrot.slane %v1258, %v1264
        %v1266 = vcombine.low %v1186, %v1187
        %v1268 = vunpack.c.l.s4 1983009808
        %v1269 = vunpack.c.0.s8 %v1268
        %v1270 = vlaneseq
        %v1271 = vshrl.u32 %v1270, 7
        %v1272 = vsub.s32 %v1269, %v1271
        %v1273 = vrot.slane %v1266, %v1272
        %v1274 = vcombine.low %v1178, %v1185
        %v1276 = vunpack.c.l.s4 1983009808
        %v1277 = vunpack.c.0.s8 %v1276
        %v1278 = vlaneseq
        %v1279 = vshrl.u32 %v1278, 7
        %v1280 = vsub.s32 %v1277, %v1279
        %v1281 = vrot.slane %v1274, %v1280
        %v1282 = vcombine.low %v1188, %v1189
        %v1284 = vunpack.c.l.s4 1983009808
        %v1285 = vunpack.c.0.s8 %v1284
        %v1286 = vlaneseq
        %v1287 = vshrl.u32 %v1286, 7
        %v1288 = vsub.s32 %v1285, %v1287
        %v1289 = vrot.slane %v1282, %v1288
        %v1290 = vcombine.low %v1265, %v1273
        %v1291 = vcombine.high %v1265, %v1273
        %v1293 = vunpack.c.l.s4 1934713408
        %v1294 = vunpack.c.0.s8 %v1293
        %v1295 = vlaneseq
        %v1296 = vshrl.u32 %v1295, 7
        %v1297 = vsub.s32 %v1294, %v1296
        %v1298 = vrot.slane %v1290, %v1297
        %v1300 = vunpack.c.l.s4 1934713408
        %v1301 = vunpack.c.0.s8 %v1300
        %v1302 = vlaneseq
        %v1303 = vshrl.u32 %v1302, 7
        %v1304 = vsub.s32 %v1301, %v1303
        %v1305 = vrot.slane %v1291, %v1304
        %v1306 = vcombine.low %v1281, %v1289
        %v1307 = vcombine.high %v1281, %v1289
        %v1309 = vunpack.c.l.s4 1934713408
        %v1310 = vunpack.c.0.s8 %v1309
        %v1311 = vlaneseq
        %v1312 = vshrl.u32 %v1311, 7
        %v1313 = vsub.s32 %v1310, %v1312
        %v1314 = vrot.slane %v1306, %v1313
        %v1316 = vunpack.c.l.s4 1934713408
        %v1317 = vunpack.c.0.s8 %v1316
        %v1318 = vlaneseq
        %v1319 = vshrl.u32 %v1318, 7
        %v1320 = vsub.s32 %v1317, %v1319
        %v1321 = vrot.slane %v1307, %v1320
        %v1322 = vcombine.low %v1298, %v1314
        %v1323 = vcombine.high %v1298, %v1314
        %v1324 = vcombine.low %v1305, %v1321
        %v1325 = vcombine.high %v1305, %v1321
        %v1326 = vcombine.low %v1230, %v1237
        %v1328 = vunpack.c.l.s4 1983009808
        %v1329 = vunpack.c.0.s8 %v1328
        %v1330 = vlaneseq
        %v1331 = vshrl.u32 %v1330, 7
        %v1332 = vsub.s32 %v1329, %v1331
        %v1333 = vrot.slane %v1326, %v1332
        %v1334 = vcombine.low %v1254, %v1255
        %v1336 = vunpack.c.l.s4 1983009808
        %v1337 = vunpack.c.0.s8 %v1336
        %v1338 = vlaneseq
        %v1339 = vshrl.u32 %v1338, 7
        %v1340 = vsub.s32 %v1337, %v1339
        %v1341 = vrot.slane %v1334, %v1340
        %v1342 = vcombine.low %v1246, %v1253
        %v1344 = vunpack.c.l.s4 1983009808
        %v1345 = vunpack.c.0.s8 %v1344
        %v1346 = vlaneseq
        %v1347 = vshrl.u32 %v1346, 7
        %v1348 = vsub.s32 %v1345, %v1347
        %v1349 = vrot.slane %v1342, %v1348
        %v1350 = vcombine.low %v1256, %v1257
        %v1352 = vunpack.c.l.s4 1983009808
        %v1353 = vunpack.c.0.s8 %v1352
        %v1354 = vlaneseq
        %v1355 = vshrl.u32 %v1354, 7
        %v1356 = vsub.s32 %v1353, %v1355
        %v1357 = vrot.slane %v1350, %v1356
        %v1358 = vcombine.low %v1333, %v1341
        %v1359 = vcombine.high %v1333, %v1341
        %v1361 = vunpack.c.l.s4 1934713408
        %v1362 = vunpack.c.0.s8 %v1361
        %v1363 = vlaneseq
        %v1364 = vshrl.u32 %v1363, 7
        %v1365 = vsub.s32 %v1362, %v1364
        %v1366 = vrot.slane %v1358, %v1365
        %v1368 = vunpack.c.l.s4 1934713408
        %v1369 = vunpack.c.0.s8 %v1368
        %v1370 = vlaneseq
        %v1371 = vshrl.u32 %v1370, 7
        %v1372 = vsub.s32 %v1369, %v1371
        %v1373 = vrot.slane %v1359, %v1372
        %v1374 = vcombine.low %v1349, %v1357
        %v1375 = vcombine.high %v1349, %v1357
        %v1377 = vunpack.c.l.s4 1934713408
        %v1378 = vunpack.c.0.s8 %v1377
        %v1379 = vlaneseq
        %v1380 = vshrl.u32 %v1379, 7
        %v1381 = vsub.s32 %v1378, %v1380
        %v1382 = vrot.slane %v1374, %v1381
        %v1384 = vunpack.c.l.s4 1934713408
        %v1385 = vunpack.c.0.s8 %v1384
        %v1386 = vlaneseq
        %v1387 = vshrl.u32 %v1386, 7
        %v1388 = vsub.s32 %v1385, %v1387
        %v1389 = vrot.slane %v1375, %v1388
        %v1390 = vcombine.low %v1366, %v1382
        %v1391 = vcombine.high %v1366, %v1382
        %v1392 = vcombine.low %v1373, %v1389
        %v1393 = vcombine.high %v1373, %v1389
        %v1394 = vpack.c.bf16 %v734, %v734
        %v1395 = vpack.c.bf16 %v802, %v802
        %v1396 = vpack.c.bf16 %v735, %v735
        %v1397 = vpack.c.bf16 %v803, %v803
        %v1398 = vpack.c.bf16 %v736, %v736
        %v1399 = vpack.c.bf16 %v804, %v804
        %v1400 = vpack.c.bf16 %v737, %v737
        %v1401 = vpack.c.bf16 %v805, %v805
        %v1402 = vpack.c.bf16 %v1030, %v1030
        %v1403 = vpack.c.bf16 %v1098, %v1098
        %v1404 = vpack.c.bf16 %v1031, %v1031
        %v1405 = vpack.c.bf16 %v1099, %v1099
        %v1406 = vpack.c.bf16 %v1032, %v1032
        %v1407 = vpack.c.bf16 %v1100, %v1100
        %v1408 = vpack.c.bf16 %v1033, %v1033
        %v1409 = vpack.c.bf16 %v1101, %v1101
        %vm1410 = vcmask 130048
        %v1412 = vsel %vm1410, %v1394, 0
        %v1415 = vsel %vm1410, %v1402, 0
        %1417 = vmatprep.subr.bf16.mxu0 0
        %1418 = vmatpush1.bf16.xpose.msra.mxu0 %v1415
        %1419 = vmatprep.subr.bf16.mxu0 0
        %1420 = vmatpush1.bf16.xpose.msra.mxu0 0
        %1421 = vmatprep.subr.bf16.mxu0 0
        %1422 = vmatpush1.bf16.xpose.msra.mxu0 0
        %1423 = vmatprep.subr.bf16.mxu0 0
        %1424 = vmatpush1.bf16.xpose.msra.mxu0 0
        %1425 = vmatprep.subr.bf16.mxu0 0
        %1426 = vmatpush1.bf16.xpose.msra.mxu0 0
        %1427 = vmatprep.subr.bf16.mxu0 0
        %1428 = vmatpush1.bf16.xpose.msra.mxu0 0
        %1429 = vmatprep.subr.bf16.mxu0 0
        %1430 = vmatpush1.bf16.xpose.msra.mxu0 0
        %1431 = vmatprep.subr.bf16.mxu0 0
        %1432 = vmatpush1.bf16.xpose.msra.mxu0 0
        %1433 = vmatprep.subr.bf16.mxu0 0
        %1434 = vmatpush1.bf16.xpose.msra.mxu0 0
        %1435 = vmatprep.subr.bf16.mxu0 0
        %1436 = vmatpush1.bf16.xpose.msra.mxu0 0
        %1437 = vmatprep.subr.bf16.mxu0 0
        %1438 = vmatpush1.bf16.xpose.msra.mxu0 0
        %1439 = vmatprep.subr.bf16.mxu0 0
        %1440 = vmatpush1.bf16.xpose.msra.mxu0 0
        %1441 = vmatprep.subr.bf16.mxu0 0
        %1442 = vmatpush1.bf16.xpose.msra.mxu0 0
        %1443 = vmatprep.subr.bf16.mxu0 0
        %1444 = vmatpush1.bf16.xpose.msra.mxu0 0
        %1445 = vmatprep.subr.bf16.mxu0 0
        %1446 = vmatpush1.bf16.xpose.msra.mxu0 0
        %1447 = vmatprep.subr.bf16.mxu0 0
        %1448 = vmatpush1.bf16.xpose.msra.mxu0 0
        %1449 = vmatprep.mubr.bf16.mxu0 0
        %1450 = vmatmul.mubr.bf16.gmra.mrb[0].mxu0 %v1412
        %v1451 = vpop.f32.mrb[0].mxu0
        %v1452 = vadd.f32 0.0, %v1451
        %v1453 = vpop.f32.mrb[0].mxu0
        %v1454 = vpop.f32.mrb[0].mxu0
        %v1455 = vpop.f32.mrb[0].mxu0
        %1456 = vdwg.mxu0
        %v1458 = vsel %vm1410, %v1395, 0
        %v1461 = vsel %vm1410, %v1403, 0
        %1463 = vmatprep.subr.bf16.mxu0 0
        %1464 = vmatpush1.bf16.xpose.msra.mxu0 %v1461
        %1465 = vmatprep.subr.bf16.mxu0 0
        %1466 = vmatpush1.bf16.xpose.msra.mxu0 0
        %1467 = vmatprep.subr.bf16.mxu0 0
        %1468 = vmatpush1.bf16.xpose.msra.mxu0 0
        %1469 = vmatprep.subr.bf16.mxu0 0
        %1470 = vmatpush1.bf16.xpose.msra.mxu0 0
        %1471 = vmatprep.subr.bf16.mxu0 0
        %1472 = vmatpush1.bf16.xpose.msra.mxu0 0
        %1473 = vmatprep.subr.bf16.mxu0 0
        %1474 = vmatpush1.bf16.xpose.msra.mxu0 0
        %1475 = vmatprep.subr.bf16.mxu0 0
        %1476 = vmatpush1.bf16.xpose.msra.mxu0 0
        %1477 = vmatprep.subr.bf16.mxu0 0
        %1478 = vmatpush1.bf16.xpose.msra.mxu0 0
        %1479 = vmatprep.subr.bf16.mxu0 0
        %1480 = vmatpush1.bf16.xpose.msra.mxu0 0
        %1481 = vmatprep.subr.bf16.mxu0 0
        %1482 = vmatpush1.bf16.xpose.msra.mxu0 0
        %1483 = vmatprep.subr.bf16.mxu0 0
        %1484 = vmatpush1.bf16.xpose.msra.mxu0 0
        %1485 = vmatprep.subr.bf16.mxu0 0
        %1486 = vmatpush1.bf16.xpose.msra.mxu0 0
        %1487 = vmatprep.subr.bf16.mxu0 0
        %1488 = vmatpush1.bf16.xpose.msra.mxu0 0
        %1489 = vmatprep.subr.bf16.mxu0 0
        %1490 = vmatpush1.bf16.xpose.msra.mxu0 0
        %1491 = vmatprep.subr.bf16.mxu0 0
        %1492 = vmatpush1.bf16.xpose.msra.mxu0 0
        %1493 = vmatprep.subr.bf16.mxu0 0
        %1494 = vmatpush1.bf16.xpose.msra.mxu0 0
        %1495 = vmatprep.mubr.bf16.mxu0 0
        %1496 = vmatmul.mubr.bf16.gmra.mrb[0].mxu0 %v1458
        %v1497 = vpop.f32.mrb[0].mxu0
        %v1498 = vadd.f32 0.0, %v1497
        %v1499 = vpop.f32.mrb[0].mxu0
        %v1500 = vpop.f32.mrb[0].mxu0
        %v1501 = vpop.f32.mrb[0].mxu0
        %1502 = vdwg.mxu0
        %v1504 = vsel %vm1410, %v1396, 0
        %v1507 = vsel %vm1410, %v1404, 0
        %1509 = vmatprep.subr.bf16.mxu0 0
        %1510 = vmatpush1.bf16.xpose.msra.mxu0 %v1507
        %1511 = vmatprep.subr.bf16.mxu0 0
        %1512 = vmatpush1.bf16.xpose.msra.mxu0 0
        %1513 = vmatprep.subr.bf16.mxu0 0
        %1514 = vmatpush1.bf16.xpose.msra.mxu0 0
        %1515 = vmatprep.subr.bf16.mxu0 0
        %1516 = vmatpush1.bf16.xpose.msra.mxu0 0
        %1517 = vmatprep.subr.bf16.mxu0 0
        %1518 = vmatpush1.bf16.xpose.msra.mxu0 0
        %1519 = vmatprep.subr.bf16.mxu0 0
        %1520 = vmatpush1.bf16.xpose.msra.mxu0 0
        %1521 = vmatprep.subr.bf16.mxu0 0
        %1522 = vmatpush1.bf16.xpose.msra.mxu0 0
        %1523 = vmatprep.subr.bf16.mxu0 0
        %1524 = vmatpush1.bf16.xpose.msra.mxu0 0
        %1525 = vmatprep.subr.bf16.mxu0 0
        %1526 = vmatpush1.bf16.xpose.msra.mxu0 0
        %1527 = vmatprep.subr.bf16.mxu0 0
        %1528 = vmatpush1.bf16.xpose.msra.mxu0 0
        %1529 = vmatprep.subr.bf16.mxu0 0
        %1530 = vmatpush1.bf16.xpose.msra.mxu0 0
        %1531 = vmatprep.subr.bf16.mxu0 0
        %1532 = vmatpush1.bf16.xpose.msra.mxu0 0
        %1533 = vmatprep.subr.bf16.mxu0 0
        %1534 = vmatpush1.bf16.xpose.msra.mxu0 0
        %1535 = vmatprep.subr.bf16.mxu0 0
        %1536 = vmatpush1.bf16.xpose.msra.mxu0 0
        %1537 = vmatprep.subr.bf16.mxu0 0
        %1538 = vmatpush1.bf16.xpose.msra.mxu0 0
        %1539 = vmatprep.subr.bf16.mxu0 0
        %1540 = vmatpush1.bf16.xpose.msra.mxu0 0
        %1541 = vmatprep.mubr.bf16.mxu0 0
        %1542 = vmatmul.mubr.bf16.gmra.mrb[0].mxu0 %v1504
        %v1543 = vpop.f32.mrb[0].mxu0
        %v1544 = vadd.f32 0.0, %v1543
        %v1545 = vpop.f32.mrb[0].mxu0
        %v1546 = vpop.f32.mrb[0].mxu0
        %v1547 = vpop.f32.mrb[0].mxu0
        %1548 = vdwg.mxu0
        %v1550 = vsel %vm1410, %v1397, 0
        %v1553 = vsel %vm1410, %v1405, 0
        %1555 = vmatprep.subr.bf16.mxu0 0
        %1556 = vmatpush1.bf16.xpose.msra.mxu0 %v1553
        %1557 = vmatprep.subr.bf16.mxu0 0
        %1558 = vmatpush1.bf16.xpose.msra.mxu0 0
        %1559 = vmatprep.subr.bf16.mxu0 0
        %1560 = vmatpush1.bf16.xpose.msra.mxu0 0
        %1561 = vmatprep.subr.bf16.mxu0 0
        %1562 = vmatpush1.bf16.xpose.msra.mxu0 0
        %1563 = vmatprep.subr.bf16.mxu0 0
        %1564 = vmatpush1.bf16.xpose.msra.mxu0 0
        %1565 = vmatprep.subr.bf16.mxu0 0
        %1566 = vmatpush1.bf16.xpose.msra.mxu0 0
        %1567 = vmatprep.subr.bf16.mxu0 0
        %1568 = vmatpush1.bf16.xpose.msra.mxu0 0
        %1569 = vmatprep.subr.bf16.mxu0 0
        %1570 = vmatpush1.bf16.xpose.msra.mxu0 0
        %1571 = vmatprep.subr.bf16.mxu0 0
        %1572 = vmatpush1.bf16.xpose.msra.mxu0 0
        %1573 = vmatprep.subr.bf16.mxu0 0
        %1574 = vmatpush1.bf16.xpose.msra.mxu0 0
        %1575 = vmatprep.subr.bf16.mxu0 0
        %1576 = vmatpush1.bf16.xpose.msra.mxu0 0
        %1577 = vmatprep.subr.bf16.mxu0 0
        %1578 = vmatpush1.bf16.xpose.msra.mxu0 0
        %1579 = vmatprep.subr.bf16.mxu0 0
        %1580 = vmatpush1.bf16.xpose.msra.mxu0 0
        %1581 = vmatprep.subr.bf16.mxu0 0
        %1582 = vmatpush1.bf16.xpose.msra.mxu0 0
        %1583 = vmatprep.subr.bf16.mxu0 0
        %1584 = vmatpush1.bf16.xpose.msra.mxu0 0
        %1585 = vmatprep.subr.bf16.mxu0 0
        %1586 = vmatpush1.bf16.xpose.msra.mxu0 0
        %1587 = vmatprep.mubr.bf16.mxu0 0
        %1588 = vmatmul.mubr.bf16.gmra.mrb[0].mxu0 %v1550
        %v1589 = vpop.f32.mrb[0].mxu0
        %v1590 = vadd.f32 0.0, %v1589
        %v1591 = vpop.f32.mrb[0].mxu0
        %v1592 = vpop.f32.mrb[0].mxu0
        %v1593 = vpop.f32.mrb[0].mxu0
        %1594 = vdwg.mxu0
        %v1596 = vsel %vm1410, %v1398, 0
        %v1599 = vsel %vm1410, %v1406, 0
        %1601 = vmatprep.subr.bf16.mxu0 0
        %1602 = vmatpush1.bf16.xpose.msra.mxu0 %v1599
        %1603 = vmatprep.subr.bf16.mxu0 0
        %1604 = vmatpush1.bf16.xpose.msra.mxu0 0
        %1605 = vmatprep.subr.bf16.mxu0 0
        %1606 = vmatpush1.bf16.xpose.msra.mxu0 0
        %1607 = vmatprep.subr.bf16.mxu0 0
        %1608 = vmatpush1.bf16.xpose.msra.mxu0 0
        %1609 = vmatprep.subr.bf16.mxu0 0
        %1610 = vmatpush1.bf16.xpose.msra.mxu0 0
        %1611 = vmatprep.subr.bf16.mxu0 0
        %1612 = vmatpush1.bf16.xpose.msra.mxu0 0
        %1613 = vmatprep.subr.bf16.mxu0 0
        %1614 = vmatpush1.bf16.xpose.msra.mxu0 0
        %1615 = vmatprep.subr.bf16.mxu0 0
        %1616 = vmatpush1.bf16.xpose.msra.mxu0 0
        %1617 = vmatprep.subr.bf16.mxu0 0
        %1618 = vmatpush1.bf16.xpose.msra.mxu0 0
        %1619 = vmatprep.subr.bf16.mxu0 0
        %1620 = vmatpush1.bf16.xpose.msra.mxu0 0
        %1621 = vmatprep.subr.bf16.mxu0 0
        %1622 = vmatpush1.bf16.xpose.msra.mxu0 0
        %1623 = vmatprep.subr.bf16.mxu0 0
        %1624 = vmatpush1.bf16.xpose.msra.mxu0 0
        %1625 = vmatprep.subr.bf16.mxu0 0
        %1626 = vmatpush1.bf16.xpose.msra.mxu0 0
        %1627 = vmatprep.subr.bf16.mxu0 0
        %1628 = vmatpush1.bf16.xpose.msra.mxu0 0
        %1629 = vmatprep.subr.bf16.mxu0 0
        %1630 = vmatpush1.bf16.xpose.msra.mxu0 0
        %1631 = vmatprep.subr.bf16.mxu0 0
        %1632 = vmatpush1.bf16.xpose.msra.mxu0 0
        %1633 = vmatprep.mubr.bf16.mxu0 0
        %1634 = vmatmul.mubr.bf16.gmra.mrb[0].mxu0 %v1596
        %v1635 = vpop.f32.mrb[0].mxu0
        %v1636 = vadd.f32 0.0, %v1635
        %v1637 = vpop.f32.mrb[0].mxu0
        %v1638 = vpop.f32.mrb[0].mxu0
        %v1639 = vpop.f32.mrb[0].mxu0
        %1640 = vdwg.mxu0
        %v1642 = vsel %vm1410, %v1399, 0
        %v1645 = vsel %vm1410, %v1407, 0
        %1647 = vmatprep.subr.bf16.mxu0 0
        %1648 = vmatpush1.bf16.xpose.msra.mxu0 %v1645
        %1649 = vmatprep.subr.bf16.mxu0 0
        %1650 = vmatpush1.bf16.xpose.msra.mxu0 0
        %1651 = vmatprep.subr.bf16.mxu0 0
        %1652 = vmatpush1.bf16.xpose.msra.mxu0 0
        %1653 = vmatprep.subr.bf16.mxu0 0
        %1654 = vmatpush1.bf16.xpose.msra.mxu0 0
        %1655 = vmatprep.subr.bf16.mxu0 0
        %1656 = vmatpush1.bf16.xpose.msra.mxu0 0
        %1657 = vmatprep.subr.bf16.mxu0 0
        %1658 = vmatpush1.bf16.xpose.msra.mxu0 0
        %1659 = vmatprep.subr.bf16.mxu0 0
        %1660 = vmatpush1.bf16.xpose.msra.mxu0 0
        %1661 = vmatprep.subr.bf16.mxu0 0
        %1662 = vmatpush1.bf16.xpose.msra.mxu0 0
        %1663 = vmatprep.subr.bf16.mxu0 0
        %1664 = vmatpush1.bf16.xpose.msra.mxu0 0
        %1665 = vmatprep.subr.bf16.mxu0 0
        %1666 = vmatpush1.bf16.xpose.msra.mxu0 0
        %1667 = vmatprep.subr.bf16.mxu0 0
        %1668 = vmatpush1.bf16.xpose.msra.mxu0 0
        %1669 = vmatprep.subr.bf16.mxu0 0
        %1670 = vmatpush1.bf16.xpose.msra.mxu0 0
        %1671 = vmatprep.subr.bf16.mxu0 0
        %1672 = vmatpush1.bf16.xpose.msra.mxu0 0
        %1673 = vmatprep.subr.bf16.mxu0 0
        %1674 = vmatpush1.bf16.xpose.msra.mxu0 0
        %1675 = vmatprep.subr.bf16.mxu0 0
        %1676 = vmatpush1.bf16.xpose.msra.mxu0 0
        %1677 = vmatprep.subr.bf16.mxu0 0
        %1678 = vmatpush1.bf16.xpose.msra.mxu0 0
        %1679 = vmatprep.mubr.bf16.mxu0 0
        %1680 = vmatmul.mubr.bf16.gmra.mrb[0].mxu0 %v1642
        %v1681 = vpop.f32.mrb[0].mxu0
        %v1682 = vadd.f32 0.0, %v1681
        %v1683 = vpop.f32.mrb[0].mxu0
        %v1684 = vpop.f32.mrb[0].mxu0
        %v1685 = vpop.f32.mrb[0].mxu0
        %1686 = vdwg.mxu0
        %v1688 = vsel %vm1410, %v1400, 0
        %v1691 = vsel %vm1410, %v1408, 0
        %1693 = vmatprep.subr.bf16.mxu0 0
        %1694 = vmatpush1.bf16.xpose.msra.mxu0 %v1691
        %1695 = vmatprep.subr.bf16.mxu0 0
        %1696 = vmatpush1.bf16.xpose.msra.mxu0 0
        %1697 = vmatprep.subr.bf16.mxu0 0
        %1698 = vmatpush1.bf16.xpose.msra.mxu0 0
        %1699 = vmatprep.subr.bf16.mxu0 0
        %1700 = vmatpush1.bf16.xpose.msra.mxu0 0
        %1701 = vmatprep.subr.bf16.mxu0 0
        %1702 = vmatpush1.bf16.xpose.msra.mxu0 0
        %1703 = vmatprep.subr.bf16.mxu0 0
        %1704 = vmatpush1.bf16.xpose.msra.mxu0 0
        %1705 = vmatprep.subr.bf16.mxu0 0
        %1706 = vmatpush1.bf16.xpose.msra.mxu0 0
        %1707 = vmatprep.subr.bf16.mxu0 0
        %1708 = vmatpush1.bf16.xpose.msra.mxu0 0
        %1709 = vmatprep.subr.bf16.mxu0 0
        %1710 = vmatpush1.bf16.xpose.msra.mxu0 0
        %1711 = vmatprep.subr.bf16.mxu0 0
        %1712 = vmatpush1.bf16.xpose.msra.mxu0 0
        %1713 = vmatprep.subr.bf16.mxu0 0
        %1714 = vmatpush1.bf16.xpose.msra.mxu0 0
        %1715 = vmatprep.subr.bf16.mxu0 0
        %1716 = vmatpush1.bf16.xpose.msra.mxu0 0
        %1717 = vmatprep.subr.bf16.mxu0 0
        %1718 = vmatpush1.bf16.xpose.msra.mxu0 0
        %1719 = vmatprep.subr.bf16.mxu0 0
        %1720 = vmatpush1.bf16.xpose.msra.mxu0 0
        %1721 = vmatprep.subr.bf16.mxu0 0
        %1722 = vmatpush1.bf16.xpose.msra.mxu0 0
        %1723 = vmatprep.subr.bf16.mxu0 0
        %1724 = vmatpush1.bf16.xpose.msra.mxu0 0
        %1725 = vmatprep.mubr.bf16.mxu0 0
        %1726 = vmatmul.mubr.bf16.gmra.mrb[0].mxu0 %v1688
        %v1727 = vpop.f32.mrb[0].mxu0
        %v1728 = vadd.f32 0.0, %v1727
        %v1729 = vpop.f32.mrb[0].mxu0
        %v1730 = vpop.f32.mrb[0].mxu0
        %v1731 = vpop.f32.mrb[0].mxu0
        %1732 = vdwg.mxu0
        %v1734 = vsel %vm1410, %v1401, 0
        %v1737 = vsel %vm1410, %v1409, 0
        %1739 = vmatprep.subr.bf16.mxu0 0
        %1740 = vmatpush1.bf16.xpose.msra.mxu0 %v1737
        %1741 = vmatprep.subr.bf16.mxu0 0
        %1742 = vmatpush1.bf16.xpose.msra.mxu0 0
        %1743 = vmatprep.subr.bf16.mxu0 0
        %1744 = vmatpush1.bf16.xpose.msra.mxu0 0
        %1745 = vmatprep.subr.bf16.mxu0 0
        %1746 = vmatpush1.bf16.xpose.msra.mxu0 0
        %1747 = vmatprep.subr.bf16.mxu0 0
        %1748 = vmatpush1.bf16.xpose.msra.mxu0 0
        %1749 = vmatprep.subr.bf16.mxu0 0
        %1750 = vmatpush1.bf16.xpose.msra.mxu0 0
        %1751 = vmatprep.subr.bf16.mxu0 0
        %1752 = vmatpush1.bf16.xpose.msra.mxu0 0
        %1753 = vmatprep.subr.bf16.mxu0 0
        %1754 = vmatpush1.bf16.xpose.msra.mxu0 0
        %1755 = vmatprep.subr.bf16.mxu0 0
        %1756 = vmatpush1.bf16.xpose.msra.mxu0 0
        %1757 = vmatprep.subr.bf16.mxu0 0
        %1758 = vmatpush1.bf16.xpose.msra.mxu0 0
        %1759 = vmatprep.subr.bf16.mxu0 0
        %1760 = vmatpush1.bf16.xpose.msra.mxu0 0
        %1761 = vmatprep.subr.bf16.mxu0 0
        %1762 = vmatpush1.bf16.xpose.msra.mxu0 0
        %1763 = vmatprep.subr.bf16.mxu0 0
        %1764 = vmatpush1.bf16.xpose.msra.mxu0 0
        %1765 = vmatprep.subr.bf16.mxu0 0
        %1766 = vmatpush1.bf16.xpose.msra.mxu0 0
        %1767 = vmatprep.subr.bf16.mxu0 0
        %1768 = vmatpush1.bf16.xpose.msra.mxu0 0
        %1769 = vmatprep.subr.bf16.mxu0 0
        %1770 = vmatpush1.bf16.xpose.msra.mxu0 0
        %1771 = vmatprep.mubr.bf16.mxu0 0
        %1772 = vmatmul.mubr.bf16.gmra.mrb[0].mxu0 %v1734
        %v1773 = vpop.f32.mrb[0].mxu0
        %v1774 = vadd.f32 0.0, %v1773
        %v1775 = vpop.f32.mrb[0].mxu0
        %v1776 = vpop.f32.mrb[0].mxu0
        %v1777 = vpop.f32.mrb[0].mxu0
        %1778 = vdwg.mxu0
        %vm1779 = vcmask 64512
        %v1780 = vsel %vm1779, %v1452, -inf
        %1781 = vmax.xlane.f32.xlu0 %v1780
        %v1782 = vpop.xlane.xlu0 %1781
        %v1783 = vsel %vm1779, %v1498, -inf
        %1784 = vmax.xlane.f32.xlu0 %v1783
        %v1785 = vpop.xlane.xlu0 %1784
        %v1786 = vsel %vm1779, %v1544, -inf
        %1787 = vmax.xlane.f32.xlu0 %v1786
        %v1788 = vpop.xlane.xlu0 %1787
        %v1789 = vsel %vm1779, %v1590, -inf
        %1790 = vmax.xlane.f32.xlu0 %v1789
        %v1791 = vpop.xlane.xlu0 %1790
        %v1792 = vsel %vm1779, %v1636, -inf
        %1793 = vmax.xlane.f32.xlu0 %v1792
        %v1794 = vpop.xlane.xlu0 %1793
        %v1795 = vsel %vm1779, %v1682, -inf
        %1796 = vmax.xlane.f32.xlu0 %v1795
        %v1797 = vpop.xlane.xlu0 %1796
        %v1798 = vsel %vm1779, %v1728, -inf
        %1799 = vmax.xlane.f32.xlu0 %v1798
        %v1800 = vpop.xlane.xlu0 %1799
        %v1801 = vsel %vm1779, %v1774, -inf
        %1802 = vmax.xlane.f32.xlu0 %v1801
        %v1803 = vpop.xlane.xlu0 %1802
        %v1804 = vsub.f32 %v1452, %v1782
        %v1805 = vsub.f32 %v1498, %v1785
        %v1806 = vsub.f32 %v1544, %v1788
        %v1807 = vsub.f32 %v1590, %v1791
        %v1808 = vsub.f32 %v1636, %v1794
        %v1809 = vsub.f32 %v1682, %v1797
        %v1810 = vsub.f32 %v1728, %v1800
        %v1811 = vsub.f32 %v1774, %v1803
        %v1812 = vmul.f32 %v1804, 1.442695
        %v1813 = vpow.pop %v1812
        %v1814 = vmul.f32 %v1805, 1.442695
        %v1815 = vpow.pop %v1814
        %v1816 = vmul.f32 %v1806, 1.442695
        %v1817 = vpow.pop %v1816
        %v1818 = vmul.f32 %v1807, 1.442695
        %v1819 = vpow.pop %v1818
        %v1820 = vmul.f32 %v1808, 1.442695
        %v1821 = vpow.pop %v1820
        %v1822 = vmul.f32 %v1809, 1.442695
        %v1823 = vpow.pop %v1822
        %v1824 = vmul.f32 %v1810, 1.442695
        %v1825 = vpow.pop %v1824
        %v1826 = vmul.f32 %v1811, 1.442695
        %v1827 = vpow.pop %v1826
        %v1828 = vsel %vm1779, %v1813, 0.0
        %1829 = vadd.xlane.f32.xlu0 %v1828
        %v1830 = vpop.xlane.xlu0 %1829
        %v1831 = vsel %vm1779, %v1815, 0.0
        %1832 = vadd.xlane.f32.xlu0 %v1831
        %v1833 = vpop.xlane.xlu0 %1832
        %v1834 = vsel %vm1779, %v1817, 0.0
        %1835 = vadd.xlane.f32.xlu0 %v1834
        %v1836 = vpop.xlane.xlu0 %1835
        %v1837 = vsel %vm1779, %v1819, 0.0
        %1838 = vadd.xlane.f32.xlu0 %v1837
        %v1839 = vpop.xlane.xlu0 %1838
        %v1840 = vsel %vm1779, %v1821, 0.0
        %1841 = vadd.xlane.f32.xlu0 %v1840
        %v1842 = vpop.xlane.xlu0 %1841
        %v1843 = vsel %vm1779, %v1823, 0.0
        %1844 = vadd.xlane.f32.xlu0 %v1843
        %v1845 = vpop.xlane.xlu0 %1844
        %v1846 = vsel %vm1779, %v1825, 0.0
        %1847 = vadd.xlane.f32.xlu0 %v1846
        %v1848 = vpop.xlane.xlu0 %1847
        %v1849 = vsel %vm1779, %v1827, 0.0
        %1850 = vadd.xlane.f32.xlu0 %v1849
        %v1851 = vpop.xlane.xlu0 %1850
        %v1852 = vrcp.pop %v1830
        %v1853 = vrcp.pop %v1833
        %v1854 = vrcp.pop %v1836
        %v1855 = vrcp.pop %v1839
        %v1856 = vrcp.pop %v1842
        %v1857 = vrcp.pop %v1845
        %v1858 = vrcp.pop %v1848
        %v1859 = vrcp.pop %v1851
        %v1860 = vmul.f32 %v1813, %v1852
        %v1861 = vmul.f32 %v1815, %v1853
        %v1862 = vmul.f32 %v1817, %v1854
        %v1863 = vmul.f32 %v1819, %v1855
        %v1864 = vmul.f32 %v1821, %v1856
        %v1865 = vmul.f32 %v1823, %v1857
        %v1866 = vmul.f32 %v1825, %v1858
        %v1867 = vmul.f32 %v1827, %v1859
        %v1868 = vpack.c.bf16 %v1860, %v1860
        %v1869 = vpack.c.bf16 %v1861, %v1861
        %v1870 = vpack.c.bf16 %v1862, %v1862
        %v1871 = vpack.c.bf16 %v1863, %v1863
        %v1872 = vpack.c.bf16 %v1864, %v1864
        %v1873 = vpack.c.bf16 %v1865, %v1865
        %v1874 = vpack.c.bf16 %v1866, %v1866
        %v1875 = vpack.c.bf16 %v1867, %v1867
        %v1876 = vpack.c.bf16 %v1322, %v1322
        %v1877 = vpack.c.bf16 %v1390, %v1390
        %v1878 = vpack.c.bf16 %v1323, %v1323
        %v1879 = vpack.c.bf16 %v1391, %v1391
        %v1880 = vpack.c.bf16 %v1324, %v1324
        %v1881 = vpack.c.bf16 %v1392, %v1392
        %v1882 = vpack.c.bf16 %v1325, %v1325
        %v1883 = vpack.c.bf16 %v1393, %v1393
        %v1885 = vsel %vm1779, %v1868, 0
        %vm1887 = vcmask 1043456
        %v1889 = vsel %vm1887, %v1876, 0
        %1891 = vmatprep.subr.bf16.mxu0 0
        %1892 = vmatpush1.bf16.msra.mxu0 %v1889
        %1893 = vmatprep.subr.bf16.mxu0 0
        %1894 = vmatpush1.bf16.msra.mxu0 0
        %1895 = vmatprep.subr.bf16.mxu0 0
        %1896 = vmatpush1.bf16.msra.mxu0 0
        %1897 = vmatprep.subr.bf16.mxu0 0
        %1898 = vmatpush1.bf16.msra.mxu0 0
        %1899 = vmatprep.subr.bf16.mxu0 0
        %1900 = vmatpush1.bf16.msra.mxu0 0
        %1901 = vmatprep.subr.bf16.mxu0 0
        %1902 = vmatpush1.bf16.msra.mxu0 0
        %1903 = vmatprep.subr.bf16.mxu0 0
        %1904 = vmatpush1.bf16.msra.mxu0 0
        %1905 = vmatprep.subr.bf16.mxu0 0
        %1906 = vmatpush1.bf16.msra.mxu0 0
        %1907 = vmatprep.subr.bf16.mxu0 0
        %1908 = vmatpush1.bf16.msra.mxu0 0
        %1909 = vmatprep.subr.bf16.mxu0 0
        %1910 = vmatpush1.bf16.msra.mxu0 0
        %1911 = vmatprep.subr.bf16.mxu0 0
        %1912 = vmatpush1.bf16.msra.mxu0 0
        %1913 = vmatprep.subr.bf16.mxu0 0
        %1914 = vmatpush1.bf16.msra.mxu0 0
        %1915 = vmatprep.subr.bf16.mxu0 0
        %1916 = vmatpush1.bf16.msra.mxu0 0
        %1917 = vmatprep.subr.bf16.mxu0 0
        %1918 = vmatpush1.bf16.msra.mxu0 0
        %1919 = vmatprep.subr.bf16.mxu0 0
        %1920 = vmatpush1.bf16.msra.mxu0 0
        %1921 = vmatprep.subr.bf16.mxu0 0
        %1922 = vmatpush1.bf16.msra.mxu0 0
        %1923 = vmatprep.mubr.bf16.mxu0 0
        %1924 = vmatmul.mubr.bf16.gmra.mrb[0].mxu0 %v1885
        %v1925 = vpop.f32.mrb[0].mxu0
        %v1926 = vadd.f32 0.0, %v1925
        %v1927 = vpop.f32.mrb[0].mxu0
        %v1928 = vpop.f32.mrb[0].mxu0
        %v1929 = vpop.f32.mrb[0].mxu0
        %1930 = vdwg.mxu0
        %v1932 = vsel %vm1779, %v1869, 0
        %v1935 = vsel %vm1887, %v1877, 0
        %1937 = vmatprep.subr.bf16.mxu0 0
        %1938 = vmatpush1.bf16.msra.mxu0 %v1935
        %1939 = vmatprep.subr.bf16.mxu0 0
        %1940 = vmatpush1.bf16.msra.mxu0 0
        %1941 = vmatprep.subr.bf16.mxu0 0
        %1942 = vmatpush1.bf16.msra.mxu0 0
        %1943 = vmatprep.subr.bf16.mxu0 0
        %1944 = vmatpush1.bf16.msra.mxu0 0
        %1945 = vmatprep.subr.bf16.mxu0 0
        %1946 = vmatpush1.bf16.msra.mxu0 0
        %1947 = vmatprep.subr.bf16.mxu0 0
        %1948 = vmatpush1.bf16.msra.mxu0 0
        %1949 = vmatprep.subr.bf16.mxu0 0
        %1950 = vmatpush1.bf16.msra.mxu0 0
        %1951 = vmatprep.subr.bf16.mxu0 0
        %1952 = vmatpush1.bf16.msra.mxu0 0
        %1953 = vmatprep.subr.bf16.mxu0 0
        %1954 = vmatpush1.bf16.msra.mxu0 0
        %1955 = vmatprep.subr.bf16.mxu0 0
        %1956 = vmatpush1.bf16.msra.mxu0 0
        %1957 = vmatprep.subr.bf16.mxu0 0
        %1958 = vmatpush1.bf16.msra.mxu0 0
        %1959 = vmatprep.subr.bf16.mxu0 0
        %1960 = vmatpush1.bf16.msra.mxu0 0
        %1961 = vmatprep.subr.bf16.mxu0 0
        %1962 = vmatpush1.bf16.msra.mxu0 0
        %1963 = vmatprep.subr.bf16.mxu0 0
        %1964 = vmatpush1.bf16.msra.mxu0 0
        %1965 = vmatprep.subr.bf16.mxu0 0
        %1966 = vmatpush1.bf16.msra.mxu0 0
        %1967 = vmatprep.subr.bf16.mxu0 0
        %1968 = vmatpush1.bf16.msra.mxu0 0
        %1969 = vmatprep.mubr.bf16.mxu0 0
        %1970 = vmatmul.mubr.bf16.gmra.mrb[0].mxu0 %v1932
        %v1971 = vpop.f32.mrb[0].mxu0
        %v1972 = vadd.f32 0.0, %v1971
        %v1973 = vpop.f32.mrb[0].mxu0
        %v1974 = vpop.f32.mrb[0].mxu0
        %v1975 = vpop.f32.mrb[0].mxu0
        %1976 = vdwg.mxu0
        %v1978 = vsel %vm1779, %v1870, 0
        %v1981 = vsel %vm1887, %v1878, 0
        %1983 = vmatprep.subr.bf16.mxu0 0
        %1984 = vmatpush1.bf16.msra.mxu0 %v1981
        %1985 = vmatprep.subr.bf16.mxu0 0
        %1986 = vmatpush1.bf16.msra.mxu0 0
        %1987 = vmatprep.subr.bf16.mxu0 0
        %1988 = vmatpush1.bf16.msra.mxu0 0
        %1989 = vmatprep.subr.bf16.mxu0 0
        %1990 = vmatpush1.bf16.msra.mxu0 0
        %1991 = vmatprep.subr.bf16.mxu0 0
        %1992 = vmatpush1.bf16.msra.mxu0 0
        %1993 = vmatprep.subr.bf16.mxu0 0
        %1994 = vmatpush1.bf16.msra.mxu0 0
        %1995 = vmatprep.subr.bf16.mxu0 0
        %1996 = vmatpush1.bf16.msra.mxu0 0
        %1997 = vmatprep.subr.bf16.mxu0 0
        %1998 = vmatpush1.bf16.msra.mxu0 0
        %1999 = vmatprep.subr.bf16.mxu0 0
        %2000 = vmatpush1.bf16.msra.mxu0 0
        %2001 = vmatprep.subr.bf16.mxu0 0
        %2002 = vmatpush1.bf16.msra.mxu0 0
        %2003 = vmatprep.subr.bf16.mxu0 0
        %2004 = vmatpush1.bf16.msra.mxu0 0
        %2005 = vmatprep.subr.bf16.mxu0 0
        %2006 = vmatpush1.bf16.msra.mxu0 0
        %2007 = vmatprep.subr.bf16.mxu0 0
        %2008 = vmatpush1.bf16.msra.mxu0 0
        %2009 = vmatprep.subr.bf16.mxu0 0
        %2010 = vmatpush1.bf16.msra.mxu0 0
        %2011 = vmatprep.subr.bf16.mxu0 0
        %2012 = vmatpush1.bf16.msra.mxu0 0
        %2013 = vmatprep.subr.bf16.mxu0 0
        %2014 = vmatpush1.bf16.msra.mxu0 0
        %2015 = vmatprep.mubr.bf16.mxu0 0
        %2016 = vmatmul.mubr.bf16.gmra.mrb[0].mxu0 %v1978
        %v2017 = vpop.f32.mrb[0].mxu0
        %v2018 = vadd.f32 0.0, %v2017
        %v2019 = vpop.f32.mrb[0].mxu0
        %v2020 = vpop.f32.mrb[0].mxu0
        %v2021 = vpop.f32.mrb[0].mxu0
        %2022 = vdwg.mxu0
        %v2024 = vsel %vm1779, %v1871, 0
        %v2027 = vsel %vm1887, %v1879, 0
        %2029 = vmatprep.subr.bf16.mxu0 0
        %2030 = vmatpush1.bf16.msra.mxu0 %v2027
        %2031 = vmatprep.subr.bf16.mxu0 0
        %2032 = vmatpush1.bf16.msra.mxu0 0
        %2033 = vmatprep.subr.bf16.mxu0 0
        %2034 = vmatpush1.bf16.msra.mxu0 0
        %2035 = vmatprep.subr.bf16.mxu0 0
        %2036 = vmatpush1.bf16.msra.mxu0 0
        %2037 = vmatprep.subr.bf16.mxu0 0
        %2038 = vmatpush1.bf16.msra.mxu0 0
        %2039 = vmatprep.subr.bf16.mxu0 0
        %2040 = vmatpush1.bf16.msra.mxu0 0
        %2041 = vmatprep.subr.bf16.mxu0 0
        %2042 = vmatpush1.bf16.msra.mxu0 0
        %2043 = vmatprep.subr.bf16.mxu0 0
        %2044 = vmatpush1.bf16.msra.mxu0 0
        %2045 = vmatprep.subr.bf16.mxu0 0
        %2046 = vmatpush1.bf16.msra.mxu0 0
        %2047 = vmatprep.subr.bf16.mxu0 0
        %2048 = vmatpush1.bf16.msra.mxu0 0
        %2049 = vmatprep.subr.bf16.mxu0 0
        %2050 = vmatpush1.bf16.msra.mxu0 0
        %2051 = vmatprep.subr.bf16.mxu0 0
        %2052 = vmatpush1.bf16.msra.mxu0 0
        %2053 = vmatprep.subr.bf16.mxu0 0
        %2054 = vmatpush1.bf16.msra.mxu0 0
        %2055 = vmatprep.subr.bf16.mxu0 0
        %2056 = vmatpush1.bf16.msra.mxu0 0
        %2057 = vmatprep.subr.bf16.mxu0 0
        %2058 = vmatpush1.bf16.msra.mxu0 0
        %2059 = vmatprep.subr.bf16.mxu0 0
        %2060 = vmatpush1.bf16.msra.mxu0 0
        %2061 = vmatprep.mubr.bf16.mxu0 0
        %2062 = vmatmul.mubr.bf16.gmra.mrb[0].mxu0 %v2024
        %v2063 = vpop.f32.mrb[0].mxu0
        %v2064 = vadd.f32 0.0, %v2063
        %v2065 = vpop.f32.mrb[0].mxu0
        %v2066 = vpop.f32.mrb[0].mxu0
        %v2067 = vpop.f32.mrb[0].mxu0
        %2068 = vdwg.mxu0
        %v2070 = vsel %vm1779, %v1872, 0
        %v2073 = vsel %vm1887, %v1880, 0
        %2075 = vmatprep.subr.bf16.mxu0 0
        %2076 = vmatpush1.bf16.msra.mxu0 %v2073
        %2077 = vmatprep.subr.bf16.mxu0 0
        %2078 = vmatpush1.bf16.msra.mxu0 0
        %2079 = vmatprep.subr.bf16.mxu0 0
        %2080 = vmatpush1.bf16.msra.mxu0 0
        %2081 = vmatprep.subr.bf16.mxu0 0
        %2082 = vmatpush1.bf16.msra.mxu0 0
        %2083 = vmatprep.subr.bf16.mxu0 0
        %2084 = vmatpush1.bf16.msra.mxu0 0
        %2085 = vmatprep.subr.bf16.mxu0 0
        %2086 = vmatpush1.bf16.msra.mxu0 0
        %2087 = vmatprep.subr.bf16.mxu0 0
        %2088 = vmatpush1.bf16.msra.mxu0 0
        %2089 = vmatprep.subr.bf16.mxu0 0
        %2090 = vmatpush1.bf16.msra.mxu0 0
        %2091 = vmatprep.subr.bf16.mxu0 0
        %2092 = vmatpush1.bf16.msra.mxu0 0
        %2093 = vmatprep.subr.bf16.mxu0 0
        %2094 = vmatpush1.bf16.msra.mxu0 0
        %2095 = vmatprep.subr.bf16.mxu0 0
        %2096 = vmatpush1.bf16.msra.mxu0 0
        %2097 = vmatprep.subr.bf16.mxu0 0
        %2098 = vmatpush1.bf16.msra.mxu0 0
        %2099 = vmatprep.subr.bf16.mxu0 0
        %2100 = vmatpush1.bf16.msra.mxu0 0
        %2101 = vmatprep.subr.bf16.mxu0 0
        %2102 = vmatpush1.bf16.msra.mxu0 0
        %2103 = vmatprep.subr.bf16.mxu0 0
        %2104 = vmatpush1.bf16.msra.mxu0 0
        %2105 = vmatprep.subr.bf16.mxu0 0
        %2106 = vmatpush1.bf16.msra.mxu0 0
        %2107 = vmatprep.mubr.bf16.mxu0 0
        %2108 = vmatmul.mubr.bf16.gmra.mrb[0].mxu0 %v2070
        %v2109 = vpop.f32.mrb[0].mxu0
        %v2110 = vadd.f32 0.0, %v2109
        %v2111 = vpop.f32.mrb[0].mxu0
        %v2112 = vpop.f32.mrb[0].mxu0
        %v2113 = vpop.f32.mrb[0].mxu0
        %2114 = vdwg.mxu0
        %v2116 = vsel %vm1779, %v1873, 0
        %v2119 = vsel %vm1887, %v1881, 0
        %2121 = vmatprep.subr.bf16.mxu0 0
        %2122 = vmatpush1.bf16.msra.mxu0 %v2119
        %2123 = vmatprep.subr.bf16.mxu0 0
        %2124 = vmatpush1.bf16.msra.mxu0 0
        %2125 = vmatprep.subr.bf16.mxu0 0
        %2126 = vmatpush1.bf16.msra.mxu0 0
        %2127 = vmatprep.subr.bf16.mxu0 0
        %2128 = vmatpush1.bf16.msra.mxu0 0
        %2129 = vmatprep.subr.bf16.mxu0 0
        %2130 = vmatpush1.bf16.msra.mxu0 0
        %2131 = vmatprep.subr.bf16.mxu0 0
        %2132 = vmatpush1.bf16.msra.mxu0 0
        %2133 = vmatprep.subr.bf16.mxu0 0
        %2134 = vmatpush1.bf16.msra.mxu0 0
        %2135 = vmatprep.subr.bf16.mxu0 0
        %2136 = vmatpush1.bf16.msra.mxu0 0
        %2137 = vmatprep.subr.bf16.mxu0 0
        %2138 = vmatpush1.bf16.msra.mxu0 0
        %2139 = vmatprep.subr.bf16.mxu0 0
        %2140 = vmatpush1.bf16.msra.mxu0 0
        %2141 = vmatprep.subr.bf16.mxu0 0
        %2142 = vmatpush1.bf16.msra.mxu0 0
        %2143 = vmatprep.subr.bf16.mxu0 0
        %2144 = vmatpush1.bf16.msra.mxu0 0
        %2145 = vmatprep.subr.bf16.mxu0 0
        %2146 = vmatpush1.bf16.msra.mxu0 0
        %2147 = vmatprep.subr.bf16.mxu0 0
        %2148 = vmatpush1.bf16.msra.mxu0 0
        %2149 = vmatprep.subr.bf16.mxu0 0
        %2150 = vmatpush1.bf16.msra.mxu0 0
        %2151 = vmatprep.subr.bf16.mxu0 0
        %2152 = vmatpush1.bf16.msra.mxu0 0
        %2153 = vmatprep.mubr.bf16.mxu0 0
        %2154 = vmatmul.mubr.bf16.gmra.mrb[0].mxu0 %v2116
        %v2155 = vpop.f32.mrb[0].mxu0
        %v2156 = vadd.f32 0.0, %v2155
        %v2157 = vpop.f32.mrb[0].mxu0
        %v2158 = vpop.f32.mrb[0].mxu0
        %v2159 = vpop.f32.mrb[0].mxu0
        %2160 = vdwg.mxu0
        %v2162 = vsel %vm1779, %v1874, 0
        %v2165 = vsel %vm1887, %v1882, 0
        %2167 = vmatprep.subr.bf16.mxu0 0
        %2168 = vmatpush1.bf16.msra.mxu0 %v2165
        %2169 = vmatprep.subr.bf16.mxu0 0
        %2170 = vmatpush1.bf16.msra.mxu0 0
        %2171 = vmatprep.subr.bf16.mxu0 0
        %2172 = vmatpush1.bf16.msra.mxu0 0
        %2173 = vmatprep.subr.bf16.mxu0 0
        %2174 = vmatpush1.bf16.msra.mxu0 0
        %2175 = vmatprep.subr.bf16.mxu0 0
        %2176 = vmatpush1.bf16.msra.mxu0 0
        %2177 = vmatprep.subr.bf16.mxu0 0
        %2178 = vmatpush1.bf16.msra.mxu0 0
        %2179 = vmatprep.subr.bf16.mxu0 0
        %2180 = vmatpush1.bf16.msra.mxu0 0
        %2181 = vmatprep.subr.bf16.mxu0 0
        %2182 = vmatpush1.bf16.msra.mxu0 0
        %2183 = vmatprep.subr.bf16.mxu0 0
        %2184 = vmatpush1.bf16.msra.mxu0 0
        %2185 = vmatprep.subr.bf16.mxu0 0
        %2186 = vmatpush1.bf16.msra.mxu0 0
        %2187 = vmatprep.subr.bf16.mxu0 0
        %2188 = vmatpush1.bf16.msra.mxu0 0
        %2189 = vmatprep.subr.bf16.mxu0 0
        %2190 = vmatpush1.bf16.msra.mxu0 0
        %2191 = vmatprep.subr.bf16.mxu0 0
        %2192 = vmatpush1.bf16.msra.mxu0 0
        %2193 = vmatprep.subr.bf16.mxu0 0
        %2194 = vmatpush1.bf16.msra.mxu0 0
        %2195 = vmatprep.subr.bf16.mxu0 0
        %2196 = vmatpush1.bf16.msra.mxu0 0
        %2197 = vmatprep.subr.bf16.mxu0 0
        %2198 = vmatpush1.bf16.msra.mxu0 0
        %2199 = vmatprep.mubr.bf16.mxu0 0
        %2200 = vmatmul.mubr.bf16.gmra.mrb[0].mxu0 %v2162
        %v2201 = vpop.f32.mrb[0].mxu0
        %v2202 = vadd.f32 0.0, %v2201
        %v2203 = vpop.f32.mrb[0].mxu0
        %v2204 = vpop.f32.mrb[0].mxu0
        %v2205 = vpop.f32.mrb[0].mxu0
        %2206 = vdwg.mxu0
        %v2208 = vsel %vm1779, %v1875, 0
        %v2211 = vsel %vm1887, %v1883, 0
        %2213 = vmatprep.subr.bf16.mxu0 0
        %2214 = vmatpush1.bf16.msra.mxu0 %v2211
        %2215 = vmatprep.subr.bf16.mxu0 0
        %2216 = vmatpush1.bf16.msra.mxu0 0
        %2217 = vmatprep.subr.bf16.mxu0 0
        %2218 = vmatpush1.bf16.msra.mxu0 0
        %2219 = vmatprep.subr.bf16.mxu0 0
        %2220 = vmatpush1.bf16.msra.mxu0 0
        %2221 = vmatprep.subr.bf16.mxu0 0
        %2222 = vmatpush1.bf16.msra.mxu0 0
        %2223 = vmatprep.subr.bf16.mxu0 0
        %2224 = vmatpush1.bf16.msra.mxu0 0
        %2225 = vmatprep.subr.bf16.mxu0 0
        %2226 = vmatpush1.bf16.msra.mxu0 0
        %2227 = vmatprep.subr.bf16.mxu0 0
        %2228 = vmatpush1.bf16.msra.mxu0 0
        %2229 = vmatprep.subr.bf16.mxu0 0
        %2230 = vmatpush1.bf16.msra.mxu0 0
        %2231 = vmatprep.subr.bf16.mxu0 0
        %2232 = vmatpush1.bf16.msra.mxu0 0
        %2233 = vmatprep.subr.bf16.mxu0 0
        %2234 = vmatpush1.bf16.msra.mxu0 0
        %2235 = vmatprep.subr.bf16.mxu0 0
        %2236 = vmatpush1.bf16.msra.mxu0 0
        %2237 = vmatprep.subr.bf16.mxu0 0
        %2238 = vmatpush1.bf16.msra.mxu0 0
        %2239 = vmatprep.subr.bf16.mxu0 0
        %2240 = vmatpush1.bf16.msra.mxu0 0
        %2241 = vmatprep.subr.bf16.mxu0 0
        %2242 = vmatpush1.bf16.msra.mxu0 0
        %2243 = vmatprep.subr.bf16.mxu0 0
        %2244 = vmatpush1.bf16.msra.mxu0 0
        %2245 = vmatprep.mubr.bf16.mxu0 0
        %2246 = vmatmul.mubr.bf16.gmra.mrb[0].mxu0 %v2208
        %v2247 = vpop.f32.mrb[0].mxu0
        %v2248 = vadd.f32 0.0, %v2247
        %v2249 = vpop.f32.mrb[0].mxu0
        %v2250 = vpop.f32.mrb[0].mxu0
        %v2251 = vpop.f32.mrb[0].mxu0
        %2252 = vdwg.mxu0
        %v2253 = vcombine.low %v1926, %v2110
        %v2254 = vcombine.high %v1926, %v2110
        %v2256 = vunpack.c.l.s4 1983009808
        %v2257 = vunpack.c.0.s8 %v2256
        %v2258 = vlaneseq
        %v2259 = vshrl.u32 %v2258, 7
        %v2260 = vsub.s32 %v2257, %v2259
        %v2261 = vrot.slane %v2253, %v2260
        %v2263 = vunpack.c.l.s4 1983009808
        %v2264 = vunpack.c.0.s8 %v2263
        %v2265 = vlaneseq
        %v2266 = vshrl.u32 %v2265, 7
        %v2267 = vsub.s32 %v2264, %v2266
        %v2268 = vrot.slane %v2254, %v2267
        %v2269 = vcombine.low %v2018, %v2202
        %v2270 = vcombine.high %v2018, %v2202
        %v2272 = vunpack.c.l.s4 1983009808
        %v2273 = vunpack.c.0.s8 %v2272
        %v2274 = vlaneseq
        %v2275 = vshrl.u32 %v2274, 7
        %v2276 = vsub.s32 %v2273, %v2275
        %v2277 = vrot.slane %v2269, %v2276
        %v2279 = vunpack.c.l.s4 1983009808
        %v2280 = vunpack.c.0.s8 %v2279
        %v2281 = vlaneseq
        %v2282 = vshrl.u32 %v2281, 7
        %v2283 = vsub.s32 %v2280, %v2282
        %v2284 = vrot.slane %v2270, %v2283
        %v2285 = vcombine.low %v2261, %v2277
        %v2286 = vcombine.high %v2261, %v2277
        %v2288 = vunpack.c.l.s4 1934713408
        %v2289 = vunpack.c.0.s8 %v2288
        %v2290 = vlaneseq
        %v2291 = vshrl.u32 %v2290, 7
        %v2292 = vsub.s32 %v2289, %v2291
        %v2293 = vrot.slane %v2285, %v2292
        %v2295 = vunpack.c.l.s4 1934713408
        %v2296 = vunpack.c.0.s8 %v2295
        %v2297 = vlaneseq
        %v2298 = vshrl.u32 %v2297, 7
        %v2299 = vsub.s32 %v2296, %v2298
        %v2300 = vrot.slane %v2286, %v2299
        %v2301 = vcombine.low %v2268, %v2284
        %v2302 = vcombine.high %v2268, %v2284
        %v2304 = vunpack.c.l.s4 1934713408
        %v2305 = vunpack.c.0.s8 %v2304
        %v2306 = vlaneseq
        %v2307 = vshrl.u32 %v2306, 7
        %v2308 = vsub.s32 %v2305, %v2307
        %v2309 = vrot.slane %v2301, %v2308
        %v2311 = vunpack.c.l.s4 1934713408
        %v2312 = vunpack.c.0.s8 %v2311
        %v2313 = vlaneseq
        %v2314 = vshrl.u32 %v2313, 7
        %v2315 = vsub.s32 %v2312, %v2314
        %v2316 = vrot.slane %v2302, %v2315
        %v2317 = vcombine.high %v2293, 0.0
        %v2318 = vcombine.high %v2300, 0.0
        %v2319 = vcombine.high %v2309, 0.0
        %v2320 = vcombine.high %v2316, 0.0
        %v2321 = vcombine.low %v1972, %v2156
        %v2322 = vcombine.high %v1972, %v2156
        %v2324 = vunpack.c.l.s4 1983009808
        %v2325 = vunpack.c.0.s8 %v2324
        %v2326 = vlaneseq
        %v2327 = vshrl.u32 %v2326, 7
        %v2328 = vsub.s32 %v2325, %v2327
        %v2329 = vrot.slane %v2321, %v2328
        %v2331 = vunpack.c.l.s4 1983009808
        %v2332 = vunpack.c.0.s8 %v2331
        %v2333 = vlaneseq
        %v2334 = vshrl.u32 %v2333, 7
        %v2335 = vsub.s32 %v2332, %v2334
        %v2336 = vrot.slane %v2322, %v2335
        %v2337 = vcombine.low %v2064, %v2248
        %v2338 = vcombine.high %v2064, %v2248
        %v2340 = vunpack.c.l.s4 1983009808
        %v2341 = vunpack.c.0.s8 %v2340
        %v2342 = vlaneseq
        %v2343 = vshrl.u32 %v2342, 7
        %v2344 = vsub.s32 %v2341, %v2343
        %v2345 = vrot.slane %v2337, %v2344
        %v2347 = vunpack.c.l.s4 1983009808
        %v2348 = vunpack.c.0.s8 %v2347
        %v2349 = vlaneseq
        %v2350 = vshrl.u32 %v2349, 7
        %v2351 = vsub.s32 %v2348, %v2350
        %v2352 = vrot.slane %v2338, %v2351
        %v2353 = vcombine.low %v2329, %v2345
        %v2354 = vcombine.high %v2329, %v2345
        %v2356 = vunpack.c.l.s4 1934713408
        %v2357 = vunpack.c.0.s8 %v2356
        %v2358 = vlaneseq
        %v2359 = vshrl.u32 %v2358, 7
        %v2360 = vsub.s32 %v2357, %v2359
        %v2361 = vrot.slane %v2353, %v2360
        %v2363 = vunpack.c.l.s4 1934713408
        %v2364 = vunpack.c.0.s8 %v2363
        %v2365 = vlaneseq
        %v2366 = vshrl.u32 %v2365, 7
        %v2367 = vsub.s32 %v2364, %v2366
        %v2368 = vrot.slane %v2354, %v2367
        %v2369 = vcombine.low %v2336, %v2352
        %v2370 = vcombine.high %v2336, %v2352
        %v2372 = vunpack.c.l.s4 1934713408
        %v2373 = vunpack.c.0.s8 %v2372
        %v2374 = vlaneseq
        %v2375 = vshrl.u32 %v2374, 7
        %v2376 = vsub.s32 %v2373, %v2375
        %v2377 = vrot.slane %v2369, %v2376
        %v2379 = vunpack.c.l.s4 1934713408
        %v2380 = vunpack.c.0.s8 %v2379
        %v2381 = vlaneseq
        %v2382 = vshrl.u32 %v2381, 7
        %v2383 = vsub.s32 %v2380, %v2382
        %v2384 = vrot.slane %v2370, %v2383
        %v2385 = vcombine.high %v2361, 0.0
        %v2386 = vcombine.high %v2368, 0.0
        %v2387 = vcombine.high %v2377, 0.0
        %v2388 = vcombine.high %v2384, 0.0
        %v2389 = vcombine.low %v2293, %v2300
        %v2391 = vunpack.c.l.s4 1983009808
        %v2392 = vunpack.c.0.s8 %v2391
        %v2393 = vlaneseq
        %v2394 = vshrl.u32 %v2393, 7
        %v2395 = vsub.s32 %v2392, %v2394
        %v2396 = vrot.slane %v2389, %v2395
        %v2397 = vcombine.low %v2317, %v2318
        %v2399 = vunpack.c.l.s4 1983009808
        %v2400 = vunpack.c.0.s8 %v2399
        %v2401 = vlaneseq
        %v2402 = vshrl.u32 %v2401, 7
        %v2403 = vsub.s32 %v2400, %v2402
        %v2404 = vrot.slane %v2397, %v2403
        %v2405 = vcombine.low %v2309, %v2316
        %v2407 = vunpack.c.l.s4 1983009808
        %v2408 = vunpack.c.0.s8 %v2407
        %v2409 = vlaneseq
        %v2410 = vshrl.u32 %v2409, 7
        %v2411 = vsub.s32 %v2408, %v2410
        %v2412 = vrot.slane %v2405, %v2411
        %v2413 = vcombine.low %v2319, %v2320
        %v2415 = vunpack.c.l.s4 1983009808
        %v2416 = vunpack.c.0.s8 %v2415
        %v2417 = vlaneseq
        %v2418 = vshrl.u32 %v2417, 7
        %v2419 = vsub.s32 %v2416, %v2418
        %v2420 = vrot.slane %v2413, %v2419
        %v2421 = vcombine.low %v2396, %v2404
        %v2422 = vcombine.high %v2396, %v2404
        %v2424 = vunpack.c.l.s4 1934713408
        %v2425 = vunpack.c.0.s8 %v2424
        %v2426 = vlaneseq
        %v2427 = vshrl.u32 %v2426, 7
        %v2428 = vsub.s32 %v2425, %v2427
        %v2429 = vrot.slane %v2421, %v2428
        %v2431 = vunpack.c.l.s4 1934713408
        %v2432 = vunpack.c.0.s8 %v2431
        %v2433 = vlaneseq
        %v2434 = vshrl.u32 %v2433, 7
        %v2435 = vsub.s32 %v2432, %v2434
        %v2436 = vrot.slane %v2422, %v2435
        %v2437 = vcombine.low %v2412, %v2420
        %v2438 = vcombine.high %v2412, %v2420
        %v2440 = vunpack.c.l.s4 1934713408
        %v2441 = vunpack.c.0.s8 %v2440
        %v2442 = vlaneseq
        %v2443 = vshrl.u32 %v2442, 7
        %v2444 = vsub.s32 %v2441, %v2443
        %v2445 = vrot.slane %v2437, %v2444
        %v2447 = vunpack.c.l.s4 1934713408
        %v2448 = vunpack.c.0.s8 %v2447
        %v2449 = vlaneseq
        %v2450 = vshrl.u32 %v2449, 7
        %v2451 = vsub.s32 %v2448, %v2450
        %v2452 = vrot.slane %v2438, %v2451
        %v2453 = vcombine.low %v2429, %v2445
        %v2454 = vcombine.high %v2429, %v2445
        %v2455 = vcombine.low %v2436, %v2452
        %v2456 = vcombine.high %v2436, %v2452
        %v2457 = vcombine.low %v2361, %v2368
        %v2459 = vunpack.c.l.s4 1983009808
        %v2460 = vunpack.c.0.s8 %v2459
        %v2461 = vlaneseq
        %v2462 = vshrl.u32 %v2461, 7
        %v2463 = vsub.s32 %v2460, %v2462
        %v2464 = vrot.slane %v2457, %v2463
        %v2465 = vcombine.low %v2385, %v2386
        %v2467 = vunpack.c.l.s4 1983009808
        %v2468 = vunpack.c.0.s8 %v2467
        %v2469 = vlaneseq
        %v2470 = vshrl.u32 %v2469, 7
        %v2471 = vsub.s32 %v2468, %v2470
        %v2472 = vrot.slane %v2465, %v2471
        %v2473 = vcombine.low %v2377, %v2384
        %v2475 = vunpack.c.l.s4 1983009808
        %v2476 = vunpack.c.0.s8 %v2475
        %v2477 = vlaneseq
        %v2478 = vshrl.u32 %v2477, 7
        %v2479 = vsub.s32 %v2476, %v2478
        %v2480 = vrot.slane %v2473, %v2479
        %v2481 = vcombine.low %v2387, %v2388
        %v2483 = vunpack.c.l.s4 1983009808
        %v2484 = vunpack.c.0.s8 %v2483
        %v2485 = vlaneseq
        %v2486 = vshrl.u32 %v2485, 7
        %v2487 = vsub.s32 %v2484, %v2486
        %v2488 = vrot.slane %v2481, %v2487
        %v2489 = vcombine.low %v2464, %v2472
        %v2490 = vcombine.high %v2464, %v2472
        %v2492 = vunpack.c.l.s4 1934713408
        %v2493 = vunpack.c.0.s8 %v2492
        %v2494 = vlaneseq
        %v2495 = vshrl.u32 %v2494, 7
        %v2496 = vsub.s32 %v2493, %v2495
        %v2497 = vrot.slane %v2489, %v2496
        %v2499 = vunpack.c.l.s4 1934713408
        %v2500 = vunpack.c.0.s8 %v2499
        %v2501 = vlaneseq
        %v2502 = vshrl.u32 %v2501, 7
        %v2503 = vsub.s32 %v2500, %v2502
        %v2504 = vrot.slane %v2490, %v2503
        %v2505 = vcombine.low %v2480, %v2488
        %v2506 = vcombine.high %v2480, %v2488
        %v2508 = vunpack.c.l.s4 1934713408
        %v2509 = vunpack.c.0.s8 %v2508
        %v2510 = vlaneseq
        %v2511 = vshrl.u32 %v2510, 7
        %v2512 = vsub.s32 %v2509, %v2511
        %v2513 = vrot.slane %v2505, %v2512
        %v2515 = vunpack.c.l.s4 1934713408
        %v2516 = vunpack.c.0.s8 %v2515
        %v2517 = vlaneseq
        %v2518 = vshrl.u32 %v2517, 7
        %v2519 = vsub.s32 %v2516, %v2518
        %v2520 = vrot.slane %v2506, %v2519
        %v2521 = vcombine.low %v2497, %v2513
        %v2522 = vcombine.high %v2497, %v2513
        %v2523 = vcombine.low %v2504, %v2520
        %v2524 = vcombine.high %v2504, %v2520
        %2527 = vrot.lane.b32.xlu0 %v2454, 16
        %v2528 = vpop.permute.xlu0 %2527
        %2529 = vrot.lane.b32.xlu0 %v2522, 16
        %v2530 = vpop.permute.xlu0 %2529
        %2535 = vrot.lane.b32.xlu0 %v2455, 32
        %v2536 = vpop.permute.xlu0 %2535
        %2537 = vrot.lane.b32.xlu0 %v2523, 32
        %v2538 = vpop.permute.xlu0 %2537
        %2543 = vrot.lane.b32.xlu0 %v2456, 48
        %v2544 = vpop.permute.xlu0 %2543
        %2545 = vrot.lane.b32.xlu0 %v2524, 48
        %v2546 = vpop.permute.xlu0 %2545
        %v2549 = vsel %vm1410, %v2453, %v2528
        %v2550 = vsel %vm1410, %v2521, %v2530
        %v2551 = vsel %vm403, %v2549, %v2536
        %v2552 = vsel %vm403, %v2550, %v2538
        %vm2553 = vcmask 392192
        %v2554 = vsel %vm2553, %v2551, %v2544
        %v2555 = vsel %vm2553, %v2552, %v2546
        %v2556 = vpack.c.bf16 %v2555, %v2554
        %v2557 = vld [vmem:[%s370] sm:$0xf]
        %v2558 = vld [vmem:[%s370 + $0x4] sm:$0xf]
        %v2559 = vld [vmem:[%s370 + $0x8] sm:$0xf]
        %v2560 = vld [vmem:[%s370 + $0xc] sm:$0xf]
        %v2561 = vld [vmem:[%s370 + $0x10] sm:$0xf]
        %v2562 = vld [vmem:[%s370 + $0x14] sm:$0xf]
        %v2563 = vld [vmem:[%s370 + $0x18] sm:$0xf]
        %v2564 = vld [vmem:[%s370 + $0x1c] sm:$0xf]
        %v2565 = vlaneseq
        %v2566 = vshrl.u32 %v2565, 7
        %v2567 = vsub.s32 0, %v2566
        %v2568 = vrot.slane %v396, %v2567
        %v2577 = vunpack.c.l.b16 %v2557
        %v2578 = vunpack.c.l.b16 %v2558
        %v2579 = vunpack.c.l.b16 %v2559
        %v2580 = vunpack.c.l.b16 %v2560
        %v2581 = vunpack.c.l.b16 %v2561
        %v2582 = vunpack.c.l.b16 %v2562
        %v2583 = vunpack.c.l.b16 %v2563
        %v2584 = vunpack.c.l.b16 %v2564
        %v2585 = vpack.c.b16 %v2578, %v2577
        %v2586 = vpack.c.b16 %v2580, %v2579
        %v2587 = vpack.c.b16 %v2582, %v2581
        %v2588 = vpack.c.b16 %v2584, %v2583
        %vm2593 = vcmask 523264
        %v2595 = vsel %vm2593, %v2556, 0
        %2597 = vmatprep.subr.bf16.mxu0 0
        %2598 = vmatpush1.bf16.msra.mxu0 %v2585
        %2599 = vmatprep.subr.bf16.mxu0 0
        %2600 = vmatpush1.bf16.msra.mxu0 %v2586
        %2601 = vmatprep.subr.bf16.mxu0 0
        %2602 = vmatpush1.bf16.msra.mxu0 %v2587
        %2603 = vmatprep.subr.bf16.mxu0 0
        %2604 = vmatpush1.bf16.msra.mxu0 %v2588
        %2605 = vmatprep.subr.bf16.mxu0 0
        %2606 = vmatpush1.bf16.msra.mxu0 0
        %2607 = vmatprep.subr.bf16.mxu0 0
        %2608 = vmatpush1.bf16.msra.mxu0 0
        %2609 = vmatprep.subr.bf16.mxu0 0
        %2610 = vmatpush1.bf16.msra.mxu0 0
        %2611 = vmatprep.subr.bf16.mxu0 0
        %2612 = vmatpush1.bf16.msra.mxu0 0
        %2613 = vmatprep.subr.bf16.mxu0 0
        %2614 = vmatpush1.bf16.msra.mxu0 0
        %2615 = vmatprep.subr.bf16.mxu0 0
        %2616 = vmatpush1.bf16.msra.mxu0 0
        %2617 = vmatprep.subr.bf16.mxu0 0
        %2618 = vmatpush1.bf16.msra.mxu0 0
        %2619 = vmatprep.subr.bf16.mxu0 0
        %2620 = vmatpush1.bf16.msra.mxu0 0
        %2621 = vmatprep.subr.bf16.mxu0 0
        %2622 = vmatpush1.bf16.msra.mxu0 0
        %2623 = vmatprep.subr.bf16.mxu0 0
        %2624 = vmatpush1.bf16.msra.mxu0 0
        %2625 = vmatprep.subr.bf16.mxu0 0
        %2626 = vmatpush1.bf16.msra.mxu0 0
        %2627 = vmatprep.subr.bf16.mxu0 0
        %2628 = vmatpush1.bf16.msra.mxu0 0
        %2629 = vmatprep.mubr.bf16.mxu0 0
        %2630 = vmatmul.mubr.bf16.gmra.mrb[0].mxu0 %v2595
        %v2631 = vpop.f32.mrb[0].mxu0
        %v2632 = vadd.f32 %v2568, %v2631
        %v2633 = vpop.f32.mrb[0].mxu0
        %v2634 = vpop.f32.mrb[0].mxu0
        %v2635 = vadd.f32 %v2568, %v2634
        %v2636 = vpop.f32.mrb[0].mxu0
        %2637 = vdwg.mxu0
        %v2638 = vadd.f32 %v401, %v2632
        %v2639 = vadd.f32 %v402, %v2635
        %v2640 = vsel %vm403, %v2638, 0.0
        %2641 = vadd.xlane.f32.xlu0 %v2640
        %v2642 = vpop.xlane.xlu0 %2641
        %v2643 = vsel %vm403, %v2639, 0.0
        %2644 = vadd.xlane.f32.xlu0 %v2643
        %v2645 = vpop.xlane.xlu0 %2644
        %v2646 = vmul.f32 %v2642, %v410
        %v2647 = vmul.f32 %v2645, %v410
        %v2648 = vsub.f32 %v2638, %v2646
        %v2649 = vsub.f32 %v2639, %v2647
        %v2650 = vmul.f32 %v2648, %v2648
        %v2651 = vmul.f32 %v2649, %v2649
        %v2652 = vsel %vm403, %v2650, 0.0
        %2653 = vadd.xlane.f32.xlu0 %v2652
        %v2654 = vpop.xlane.xlu0 %2653
        %v2655 = vsel %vm403, %v2651, 0.0
        %2656 = vadd.xlane.f32.xlu0 %v2655
        %v2657 = vpop.xlane.xlu0 %2656
        %v2658 = vmul.f32 %v2654, %v410
        %v2659 = vmul.f32 %v2657, %v410
        %v2660 = vadd.f32 %v2658, 1e-05
        %v2661 = vadd.f32 %v2659, 1e-05
        %v2662 = vrsqrt.pop %v2660
        %v2663 = vrsqrt.pop %v2661
        %v2664 = vmul.f32 %v2648, %v2662
        %v2665 = vmul.f32 %v2649, %v2663
        %v2666 = vlaneseq
        %v2667 = vshrl.u32 %v2666, 7
        %v2668 = vsub.s32 0, %v2667
        %v2669 = vrot.slane %v397, %v2668
        %v2670 = vmul.f32 %v2664, %v2669
        %v2671 = vmul.f32 %v2665, %v2669
        %v2672 = vlaneseq
        %v2673 = vshrl.u32 %v2672, 7
        %v2674 = vsub.s32 0, %v2673
        %v2675 = vrot.slane %v398, %v2674
        %v2676 = vadd.f32 %v2670, %v2675
        %v2677 = vadd.f32 %v2671, %v2675
        %v2678 = vpack.c.bf16 %v2677, %v2676
        %v2679 = vld [vmem:[%s375] sm:$0xf]
        %v2680 = vld [vmem:[%s375 + $0x4] sm:$0xf]
        %v2681 = vld [vmem:[%s375 + $0x8] sm:$0xf]
        %v2682 = vld [vmem:[%s375 + $0xc] sm:$0xf]
        %v2683 = vlaneseq
        %v2684 = vshrl.u32 %v2683, 7
        %v2685 = vsub.s32 0, %v2684
        %v2686 = vrot.slane %v400, %v2685
        %v2691 = vunpack.c.l.b16 %v2679
        %v2692 = vunpack.c.l.b16 %v2680
        %v2693 = vunpack.c.l.b16 %v2681
        %v2694 = vunpack.c.l.b16 %v2682
        %v2695 = vpack.c.b16 %v2692, %v2691
        %v2696 = vpack.c.b16 %v2694, %v2693
        %v2700 = vsel %vm403, %v2678, 0
        %2702 = vmatprep.subr.bf16.mxu0 0
        %2703 = vmatpush1.bf16.msra.mxu0 %v2695
        %2704 = vmatprep.subr.bf16.mxu0 0
        %2705 = vmatpush1.bf16.msra.mxu0 %v2696
        %2706 = vmatprep.subr.bf16.mxu0 0
        %2707 = vmatpush1.bf16.msra.mxu0 0
        %2708 = vmatprep.subr.bf16.mxu0 0
        %2709 = vmatpush1.bf16.msra.mxu0 0
        %2710 = vmatprep.subr.bf16.mxu0 0
        %2711 = vmatpush1.bf16.msra.mxu0 0
        %2712 = vmatprep.subr.bf16.mxu0 0
        %2713 = vmatpush1.bf16.msra.mxu0 0
        %2714 = vmatprep.subr.bf16.mxu0 0
        %2715 = vmatpush1.bf16.msra.mxu0 0
        %2716 = vmatprep.subr.bf16.mxu0 0
        %2717 = vmatpush1.bf16.msra.mxu0 0
        %2718 = vmatprep.subr.bf16.mxu0 0
        %2719 = vmatpush1.bf16.msra.mxu0 0
        %2720 = vmatprep.subr.bf16.mxu0 0
        %2721 = vmatpush1.bf16.msra.mxu0 0
        %2722 = vmatprep.subr.bf16.mxu0 0
        %2723 = vmatpush1.bf16.msra.mxu0 0
        %2724 = vmatprep.subr.bf16.mxu0 0
        %2725 = vmatpush1.bf16.msra.mxu0 0
        %2726 = vmatprep.subr.bf16.mxu0 0
        %2727 = vmatpush1.bf16.msra.mxu0 0
        %2728 = vmatprep.subr.bf16.mxu0 0
        %2729 = vmatpush1.bf16.msra.mxu0 0
        %2730 = vmatprep.subr.bf16.mxu0 0
        %2731 = vmatpush1.bf16.msra.mxu0 0
        %2732 = vmatprep.subr.bf16.mxu0 0
        %2733 = vmatpush1.bf16.msra.mxu0 0
        %2734 = vmatprep.mubr.bf16.mxu0 0
        %2735 = vmatmul.mubr.bf16.gmra.mrb[0].mxu0 %v2700
        %v2736 = vpop.f32.mrb[0].mxu0
        %v2737 = vadd.f32 %v2686, %v2736
        %v2738 = vpop.f32.mrb[0].mxu0
        %v2739 = vpop.f32.mrb[0].mxu0
        %v2740 = vadd.f32 %v2686, %v2739
        %v2741 = vpop.f32.mrb[0].mxu0
        %2742 = vdwg.mxu0
        %v2743 = vmul.f32 %v2737, 0.5
        %v2744 = vmul.f32 %v2740, 0.5
        %v2745 = vmul.f32 %v2737, 0.044715
        %v2746 = vmul.f32 %v2740, 0.044715
        %v2747 = vmul.f32 %v2745, %v2737
        %v2748 = vmul.f32 %v2746, %v2740
        %v2749 = vmul.f32 %v2747, %v2737
        %v2750 = vmul.f32 %v2748, %v2740
        %v2751 = vadd.f32 %v2737, %v2749
        %v2752 = vadd.f32 %v2740, %v2750
        %v2753 = vmul.f32 %v2751, 0.7978846
        %v2754 = vmul.f32 %v2752, 0.7978846
        %v2755 = vtanh.pop %v2753
        %v2756 = vtanh.pop %v2754
        %v2757 = vadd.f32 %v2755, 1.0
        %v2758 = vadd.f32 %v2756, 1.0
        %v2759 = vmul.f32 %v2743, %v2757
        %v2760 = vmul.f32 %v2744, %v2758
        %v2761 = vpack.c.bf16 %v2760, %v2759
        %v2762 = vld [vmem:[%s380] sm:$0xf]
        %v2763 = vld [vmem:[%s380 + $0x4] sm:$0xf]
        %v2764 = vld [vmem:[%s380 + $0x8] sm:$0xf]
        %v2765 = vld [vmem:[%s380 + $0xc] sm:$0xf]
        %v2766 = vld [vmem:[%s380 + $0x10] sm:$0xf]
        %v2767 = vld [vmem:[%s380 + $0x14] sm:$0xf]
        %v2768 = vld [vmem:[%s380 + $0x18] sm:$0xf]
        %v2769 = vld [vmem:[%s380 + $0x1c] sm:$0xf]
        %v2770 = vlaneseq
        %v2771 = vshrl.u32 %v2770, 7
        %v2772 = vsub.s32 0, %v2771
        %v2773 = vrot.slane %v399, %v2772
        %v2782 = vunpack.c.l.b16 %v2762
        %v2783 = vunpack.c.l.b16 %v2763
        %v2784 = vunpack.c.l.b16 %v2764
        %v2785 = vunpack.c.l.b16 %v2765
        %v2786 = vunpack.c.l.b16 %v2766
        %v2787 = vunpack.c.l.b16 %v2767
        %v2788 = vunpack.c.l.b16 %v2768
        %v2789 = vunpack.c.l.b16 %v2769
        %v2790 = vpack.c.b16 %v2783, %v2782
        %v2791 = vpack.c.b16 %v2785, %v2784
        %v2792 = vpack.c.b16 %v2787, %v2786
        %v2793 = vpack.c.b16 %v2789, %v2788
        %v2799 = vsel %vm2593, %v2761, 0
        %2801 = vmatprep.subr.bf16.mxu0 0
        %2802 = vmatpush1.bf16.msra.mxu0 %v2790
        %2803 = vmatprep.subr.bf16.mxu0 0
        %2804 = vmatpush1.bf16.msra.mxu0 %v2791
        %2805 = vmatprep.subr.bf16.mxu0 0
        %2806 = vmatpush1.bf16.msra.mxu0 %v2792
        %2807 = vmatprep.subr.bf16.mxu0 0
        %2808 = vmatpush1.bf16.msra.mxu0 %v2793
        %2809 = vmatprep.subr.bf16.mxu0 0
        %2810 = vmatpush1.bf16.msra.mxu0 0
        %2811 = vmatprep.subr.bf16.mxu0 0
        %2812 = vmatpush1.bf16.msra.mxu0 0
        %2813 = vmatprep.subr.bf16.mxu0 0
        %2814 = vmatpush1.bf16.msra.mxu0 0
        %2815 = vmatprep.subr.bf16.mxu0 0
        %2816 = vmatpush1.bf16.msra.mxu0 0
        %2817 = vmatprep.subr.bf16.mxu0 0
        %2818 = vmatpush1.bf16.msra.mxu0 0
        %2819 = vmatprep.subr.bf16.mxu0 0
        %2820 = vmatpush1.bf16.msra.mxu0 0
        %2821 = vmatprep.subr.bf16.mxu0 0
        %2822 = vmatpush1.bf16.msra.mxu0 0
        %2823 = vmatprep.subr.bf16.mxu0 0
        %2824 = vmatpush1.bf16.msra.mxu0 0
        %2825 = vmatprep.subr.bf16.mxu0 0
        %2826 = vmatpush1.bf16.msra.mxu0 0
        %2827 = vmatprep.subr.bf16.mxu0 0
        %2828 = vmatpush1.bf16.msra.mxu0 0
        %2829 = vmatprep.subr.bf16.mxu0 0
        %2830 = vmatpush1.bf16.msra.mxu0 0
        %2831 = vmatprep.subr.bf16.mxu0 0
        %2832 = vmatpush1.bf16.msra.mxu0 0
        %2833 = vmatprep.mubr.bf16.mxu0 0
        %2834 = vmatmul.mubr.bf16.gmra.mrb[0].mxu0 %v2799
        %v2835 = vpop.f32.mrb[0].mxu0
        %v2836 = vadd.f32 %v2773, %v2835
        %v2837 = vpop.f32.mrb[0].mxu0
        %v2838 = vpop.f32.mrb[0].mxu0
        %v2839 = vadd.f32 %v2773, %v2838
        %v2840 = vpop.f32.mrb[0].mxu0
        %2841 = vdwg.mxu0
        %v2842 = vadd.f32 %v2638, %v2836
        %v2843 = vadd.f32 %v2639, %v2839
        %2844 = vst.msk [vmem:[#allocation2] sm:$0xff] %vm403, %v2842
        %2845 = vst.msk [vmem:[#allocation2 + $0x8] sm:$0xff] %vm403, %v2843
        %p2846 = scmp.eq.s32.totalorder %s24, 1
        // Predicated region
        $region53: #{tpu_custom_call.1} parent=47 // pred_check
          %p2847 = pneg %p2846
        $region54: #{tpu_custom_call.1} parent=47 // pred_check_branch
          %2849 = sbr.rel (%p2847) target = $region56
        $region55: #{tpu_custom_call.1} parent=47 // pred_region
          %v2850 = vsel %vm403, %v2842, 0.0
          %v2851 = vrot.slane %v2850, 4
          %v2852 = vadd.f32 %v2850, %v2851
          %v2853 = vrot.slane %v2852, 2
          %v2854 = vadd.f32 %v2852, %v2853
          %v2855 = vrot.slane %v2854, 1
          %v2856 = vadd.f32 %v2854, %v2855
          %v2857 = vsel %vm403, %v2843, 0.0
          %v2858 = vrot.slane %v2857, 4
          %v2859 = vadd.f32 %v2857, %v2858
          %v2860 = vrot.slane %v2859, 2
          %v2861 = vadd.f32 %v2859, %v2860
          %v2862 = vrot.slane %v2861, 1
          %v2863 = vadd.f32 %v2861, %v2862
          %v2864 = vmul.f32 %v2856, 0.125
          %v2865 = vmul.f32 %v2863, 0.125
          %vm2868 = vcmask 1041409
          %v2869 = vsel %vm2868, %v2865, %v2864
          %v2871 = vsel %vm403, %v2869, 0.0
          %2872 = vst [vmem:[#allocation3] sm:$0x3] %v2871
        $region56: #{tpu_custom_call.1} parent=47 // pred_fallthru
          _
        // Predicated region
        $region57: #{tpu_custom_call.1} parent=47 // pred_check
          %p2873 = pneg %p226
        $region58: #{tpu_custom_call.1} parent=47 // pred_check_branch
          %2875 = sbr.rel (%p2873) target = $region60
        $region59: #{tpu_custom_call.1} parent=47 // pred_region
          %s2877 = ssub.s32 32, 32
          %2878 = vsyncadd [#allocation4], %s2877
          %s2879 = smul.addr %s23, 32
          %s2880 = scalar_lea.hbm %s7, %s2879
          %s2882 = sshll.u32 [#allocation3], 4
          %s2883 = int_to_ptr.vmem [resolvable:$true] %s2882
          %2885 = dma.vmem_to_hbm [thread:$0]  %s2883, 32, %s2880, [#allocation4]
        $region60: #{tpu_custom_call.1} parent=47 // pred_fallthru
          _
        // Predicated region
        $region61: #{tpu_custom_call.1} parent=47 // pred_check
          %p2886 = pneg %p226
        $region62: #{tpu_custom_call.1} parent=47 // pred_check_branch
          %2888 = sbr.rel (%p2886) target = $region64
        $region63: #{tpu_custom_call.1} parent=47 // pred_region
          %2889 = dma.done [#allocation4], 32
        $region64: #{tpu_custom_call.1} parent=47 // pred_fallthru
          _
      $region48: #{tpu_custom_call.1} parent=5 // pred_fallthru
        _
      %p2890 = scmp.le.s32.totalorder 2, %s14
      // Predicated region
      $region65: #{tpu_custom_call.1} parent=5 // pred_check
        %p2891 = pneg %p2890
      $region66: #{tpu_custom_call.1} parent=5 // pred_check_branch
        %2893 = sbr.rel (%p2891) target = $region68
      $region67: #{tpu_custom_call.1} parent=5 // pred_region
        %s2894 = ssub.s32 %s14, 2
      $region68: #{tpu_custom_call.1} parent=5 // pred_fallthru
        _
    $region6: #{tpu_custom_call.1} parent=1 // loop_footer
      %s18 = sadd.s32 1, %s14
    $region7: #{tpu_custom_call.1} parent=1 // loop_footer_branch
      %13 = sbr.rel target = $region3
    $region8: #{tpu_custom_call.1} parent=1 // loop_exit
      _
    %2895 = vsyncpa [#allocation4], 1
    %s2896 = scalar_lea.sflag [#allocation4], 1
    %2897 = vsyncpa %s2896, 1

</llo_original>
